<compile_context>
chip_gen: v5e
topology: v5e:2x2
jax: 0.10.0
libtpu: 0.0.40
codegen_flags: <defaults>
</compile_context>

<pallas_src>
import functools

import numpy as np
import jax
import jax.numpy as jnp
from jax.experimental import pallas as pl
from jax.experimental.pallas import tpu as pltpu

K = 3  # conv kernel size
TAPS = [(kh - 1, kw - 1) for kh in range(K) for kw in range(K)]  # (dh, dw), t = kh*3+kw


def ga_kernel(x_ref, y_ref, w1x_ref, w1y_ref, b1_ref, w2_ref, b2_ref, mask_ref,
              xo_ref, yo_ref, *, C, H, W):
    HW = H * W
    x = x_ref[0].astype(jnp.float32)   # (C, HW)  channels on sublanes, spatial lane-dense
    y = y_ref[0].astype(jnp.float32)   # (1, HW)

    # ---- conv1: relu(conv3x3(x_cat, W1) + b1) with the concat folded into weights:
    #      sum_t W1x[t] @ roll_t(x) + W1y[t] * roll_t(y)
    acc = None
    for t, (dh, dw) in enumerate(TAPS):
        d = dh * W + dw
        if d == 0:
            xs, ys = x, y
        else:
            m = mask_ref[t]                          # (1, HW) 0/1 border mask (precomputed)
            xs = pltpu.roll(x, (-d) % HW, 1) * m     # XLU roll, lane axis
            ys = pltpu.roll(y, (-d) % HW, 1) * m
        contrib = jnp.dot(w1x_ref[t], xs,
                          preferred_element_type=jnp.float32)   # MXU (C,C)@(C,HW)
        contrib = contrib + w1y_ref[t] * ys                     # VPU outer product
        acc = contrib if acc is None else acc + contrib
    x_out = x + jnp.maximum(acc + b1_ref[...], 0.0)              # (C, HW)
    xo_ref[0] = x_out.astype(xo_ref.dtype)

    # ---- score conv: conv3x3(x_out, W2) + b2, 1 output channel.
    # Channel reduction per tap on the MXU, then nine cheap (1,HW) lane rolls.
    z = jnp.dot(w2_ref[...], x_out, preferred_element_type=jnp.float32)   # (9, HW)
    s = None
    for t, (dh, dw) in enumerate(TAPS):
        d = dh * W + dw
        zt = z[t:t + 1, :]                                        # (1, HW), static slice
        if d != 0:
            zt = pltpu.roll(zt, (-d) % HW, 1) * mask_ref[t]
        s = zt if s is None else s + zt
    yo_ref[0] = (y + s + b2_ref[...]).astype(yo_ref.dtype)


def ga_forward(x, y, w1, b1, w2, b2, *, group):
    """x: (N,C,H,W), y: (N,1,H,W), w1: (C, C+group, 3, 3), b1: (C,),
    w2: (1, C, 3, 3), b2: (1,)  ->  (x_out, y_out)."""
    N, C, H, W = x.shape
    S = C // group
    HW = H * W
    KK = K * K

    w1 = jnp.asarray(w1, jnp.float32)
    w2 = jnp.asarray(w2, jnp.float32)

    # Fold the channel-interleaved concat into conv1's weights.
    # x_cat channel g*(S+1)+j  <- x channel g*S+j ;  channel g*(S+1)+S <- y.
    w1_r = w1.reshape(C, group, S + 1, K, K)
    w1x = w1_r[:, :, :S].reshape(C, C, K, K)          # columns acting on x
    w1y = w1_r[:, :, S].sum(axis=1)                   # (C, K, K), y columns summed

    # Tap-major layouts for the kernel.
    w1x_t = jnp.transpose(w1x, (2, 3, 0, 1)).reshape(KK, C, C)   # [t, co, ci]
    w1y_t = jnp.transpose(w1y, (1, 2, 0)).reshape(KK, C, 1)      # [t, co, 0]
    w2_tap = jnp.transpose(w2[0], (1, 2, 0)).reshape(KK, C)      # [t, ci]
    b1_c = jnp.asarray(b1, jnp.float32).reshape(C, 1)
    b2_c = jnp.asarray(b2, jnp.float32).reshape(1, 1)

    # Precomputed border masks for the 9 taps over the lane-dense flattened axis.
    hh, ww = np.meshgrid(np.arange(H), np.arange(W), indexing="ij")
    masks = np.zeros((KK, 1, HW), np.float32)
    for t, (dh, dw) in enumerate(TAPS):
        valid = (hh + dh >= 0) & (hh + dh < H) & (ww + dw >= 0) & (ww + dw < W)
        masks[t, 0] = valid.reshape(-1).astype(np.float32)
    masks = jnp.asarray(masks)

    x_flat = x.reshape(N, C, HW)
    y_flat = y.reshape(N, 1, HW)

    kern = functools.partial(ga_kernel, C=C, H=H, W=W)
    xo, yo = pl.pallas_call(
        kern,
        out_shape=(jax.ShapeDtypeStruct((N, C, HW), x.dtype),
                   jax.ShapeDtypeStruct((N, 1, HW), y.dtype)),
        grid_spec=pltpu.PrefetchScalarGridSpec(
            num_scalar_prefetch=0,
            grid=(N,),
            in_specs=[
                pl.BlockSpec((1, C, HW), lambda n: (n, 0, 0)),      # x
                pl.BlockSpec((1, 1, HW), lambda n: (n, 0, 0)),      # y
                pl.BlockSpec(memory_space=pltpu.MemorySpace.VMEM),  # w1x  (9,C,C)
                pl.BlockSpec(memory_space=pltpu.MemorySpace.VMEM),  # w1y  (9,C,1)
                pl.BlockSpec(memory_space=pltpu.MemorySpace.VMEM),  # b1   (C,1)
                pl.BlockSpec(memory_space=pltpu.MemorySpace.VMEM),  # w2   (9,C)
                pl.BlockSpec(memory_space=pltpu.MemorySpace.VMEM),  # b2   (1,1)
                pl.BlockSpec(memory_space=pltpu.MemorySpace.VMEM),  # masks(9,1,HW)
            ],
            out_specs=[
                pl.BlockSpec((1, C, HW), lambda n: (n, 0, 0)),
                pl.BlockSpec((1, 1, HW), lambda n: (n, 0, 0)),
            ],
        ),
        compiler_params=pltpu.CompilerParams(
            dimension_semantics=("parallel",),
        ),
    )(x_flat, y_flat, w1x_t, w1y_t, b1_c, w2_tap, b2_c, masks)
    return xo.reshape(N, C, H, W), yo.reshape(N, 1, H, W)


def ga_ref(x, y, w1, b1, w2, b2, group):
    """Pure-JAX reference mirroring the PyTorch GA module."""
    C = x.shape[1]
    S = C // group
    parts = []
    for g in range(group):
        parts.append(x[:, g * S:(g + 1) * S])
        parts.append(y)
    x_cat = jnp.concatenate(parts, axis=1)
    dn = ("NCHW", "OIHW", "NCHW")
    t = jax.lax.conv_general_dilated(
        x_cat, w1, (1, 1), [(1, 1), (1, 1)], dimension_numbers=dn,
        precision=jax.lax.Precision.HIGHEST) + b1[None, :, None, None]
    x_new = x + jax.nn.relu(t)
    s = jax.lax.conv_general_dilated(
        x_new, w2, (1, 1), [(1, 1), (1, 1)], dimension_numbers=dn,
        precision=jax.lax.Precision.HIGHEST) + b2[None, :, None, None]
    y_new = y + s
    return x_new, y_new


if __name__ == "__main__":
    key = jax.random.PRNGKey(0)
    kx, ky, k1, kb1, k2, kb2 = jax.random.split(key, 6)

    channel, subchannel = 8, 4
    group = channel // subchannel
    N, C, H, W = 2, channel, 16, 16

    x = jax.random.normal(kx, (N, C, H, W), dtype=jnp.float32)
    y = jax.random.normal(ky, (N, 1, H, W), dtype=jnp.float32)
    w1 = jax.random.normal(k1, (C, C + group, K, K), dtype=jnp.float32) * 0.1
    b1 = jax.random.normal(kb1, (C,), dtype=jnp.float32) * 0.1
    w2 = jax.random.normal(k2, (1, C, K, K), dtype=jnp.float32) * 0.1
    b2 = jax.random.normal(kb2, (1,), dtype=jnp.float32) * 0.1

    xo, yo = ga_forward(x, y, w1, b1, w2, b2, group=group)
    xo = jax.block_until_ready(xo)
    yo = jax.block_until_ready(yo)

    xr, yr = ga_ref(x, y, w1, b1, w2, b2, group)
    ex = float(jnp.max(jnp.abs(xo - xr)))
    ey = float(jnp.max(jnp.abs(yo - yr)))
    assert jnp.allclose(xo, xr, rtol=2e-2, atol=2e-2), f"x max_err={ex}"
    assert jnp.allclose(yo, yr, rtol=2e-2, atol=2e-2), f"y max_err={ey}"
    print("KERNEL_OK")
</pallas_src>

<mosaic_0001>
module attributes {stable_mosaic.version = 11 : i64} {
  func.func @ga_kernel(%arg0: i32, %arg1: memref<1x8x256xf32, #tpu.memory_space<vmem>>, %arg2: memref<1x1x256xf32, #tpu.memory_space<vmem>>, %arg3: memref<9x8x8xf32, #tpu.memory_space<vmem>>, %arg4: memref<9x8x1xf32, #tpu.memory_space<vmem>>, %arg5: memref<8x1xf32, #tpu.memory_space<vmem>>, %arg6: memref<9x8xf32, #tpu.memory_space<vmem>>, %arg7: memref<1x1xf32, #tpu.memory_space<vmem>>, %arg8: memref<9x1x256xf32, #tpu.memory_space<vmem>>, %arg9: memref<1x8x256xf32, #tpu.memory_space<vmem>>, %arg10: memref<1x1x256xf32, #tpu.memory_space<vmem>>) attributes {dimension_semantics = [#tpu.dimension_semantics<parallel>], iteration_bounds = array<i64: 2>, scalar_prefetch = 0 : i64, scratch_operands = 0 : i64, tpu.core_type = #tpu.core_type<tc>, window_params = [{transform_indices = @transform_0, window_bounds = array<i64: 1, 8, 256>}, {transform_indices = @transform_1, window_bounds = array<i64: 1, 1, 256>}, {pipeline_mode = #tpu.pipeline_mode<synchronous>, transform_indices = @transform_2, window_bounds = array<i64: 9, 8, 8>}, {pipeline_mode = #tpu.pipeline_mode<synchronous>, transform_indices = @transform_3, window_bounds = array<i64: 9, 8, 1>}, {pipeline_mode = #tpu.pipeline_mode<synchronous>, transform_indices = @transform_4, window_bounds = array<i64: 8, 1>}, {pipeline_mode = #tpu.pipeline_mode<synchronous>, transform_indices = @transform_5, window_bounds = array<i64: 9, 8>}, {pipeline_mode = #tpu.pipeline_mode<synchronous>, transform_indices = @transform_6, window_bounds = array<i64: 1, 1>}, {pipeline_mode = #tpu.pipeline_mode<synchronous>, transform_indices = @transform_7, window_bounds = array<i64: 9, 1, 256>}, {transform_indices = @transform_8, window_bounds = array<i64: 1, 8, 256>}, {transform_indices = @transform_9, window_bounds = array<i64: 1, 1, 256>}]} {
    %c0 = arith.constant 0 : index
    %c0_0 = arith.constant 0 : index
    %c0_1 = arith.constant 0 : index
    %0 = vector.load %arg1[%c0, %c0_0, %c0_1] : memref<1x8x256xf32, #tpu.memory_space<vmem>>, vector<1x8x256xf32>
    %1 = vector.shape_cast %0 : vector<1x8x256xf32> to vector<8x256xf32>
    %c0_2 = arith.constant 0 : index
    %c0_3 = arith.constant 0 : index
    %c0_4 = arith.constant 0 : index
    %2 = vector.load %arg2[%c0_2, %c0_3, %c0_4] : memref<1x1x256xf32, #tpu.memory_space<vmem>>, vector<1x1x256xf32>
    %3 = vector.shape_cast %2 : vector<1x1x256xf32> to vector<1x256xf32>
    %c0_5 = arith.constant 0 : index
    %c0_6 = arith.constant 0 : index
    %c0_7 = arith.constant 0 : index
    %4 = vector.load %arg8[%c0_5, %c0_6, %c0_7] : memref<9x1x256xf32, #tpu.memory_space<vmem>>, vector<1x1x256xf32>
    %5 = vector.shape_cast %4 : vector<1x1x256xf32> to vector<1x256xf32>
    %c17_i32 = arith.constant 17 : i32
    %6 = tpu.dynamic_rotate %1 by %c17_i32 dim 1 : vector<8x256xf32>, i32 -> vector<8x256xf32>
    %7 = vector.broadcast %5 : vector<1x256xf32> to vector<8x256xf32>
    %8 = arith.mulf %6, %7 : vector<8x256xf32>
    %c17_i32_8 = arith.constant 17 : i32
    %9 = tpu.dynamic_rotate %3 by %c17_i32_8 dim 1 : vector<1x256xf32>, i32 -> vector<1x256xf32>
    %10 = arith.mulf %9, %5 : vector<1x256xf32>
    %c0_9 = arith.constant 0 : index
    %c0_10 = arith.constant 0 : index
    %c0_11 = arith.constant 0 : index
    %11 = vector.load %arg3[%c0_9, %c0_10, %c0_11] : memref<9x8x8xf32, #tpu.memory_space<vmem>>, vector<1x8x8xf32>
    %12 = vector.shape_cast %11 : vector<1x8x8xf32> to vector<8x8xf32>
    %cst = arith.constant dense<0.000000e+00> : vector<8x256xf32>
    %13 = tpu.matmul %12, %8, %cst {dimension_numbers = #tpu.dot_dimension_numbers<[1], [0], [0], [1], [0, 0, 1, 1], [], []>} : vector<8x8xf32>, vector<8x256xf32>, vector<8x256xf32> -> vector<8x256xf32>
    %c0_12 = arith.constant 0 : index
    %c0_13 = arith.constant 0 : index
    %c0_14 = arith.constant 0 : index
    %14 = vector.load %arg4[%c0_12, %c0_13, %c0_14] : memref<9x8x1xf32, #tpu.memory_space<vmem>>, vector<1x8x1xf32>
    %15 = vector.shape_cast %14 : vector<1x8x1xf32> to vector<8x1xf32>
    %16 = vector.broadcast %15 : vector<8x1xf32> to vector<8x256xf32>
    %17 = vector.broadcast %10 : vector<1x256xf32> to vector<8x256xf32>
    %18 = arith.mulf %16, %17 : vector<8x256xf32>
    %19 = arith.addf %13, %18 : vector<8x256xf32>
    %c1 = arith.constant 1 : index
    %c0_15 = arith.constant 0 : index
    %c0_16 = arith.constant 0 : index
    %20 = vector.load %arg8[%c1, %c0_15, %c0_16] : memref<9x1x256xf32, #tpu.memory_space<vmem>>, vector<1x1x256xf32>
    %21 = vector.shape_cast %20 : vector<1x1x256xf32> to vector<1x256xf32>
    %c16_i32 = arith.constant 16 : i32
    %22 = tpu.dynamic_rotate %1 by %c16_i32 dim 1 : vector<8x256xf32>, i32 -> vector<8x256xf32>
    %23 = vector.broadcast %21 : vector<1x256xf32> to vector<8x256xf32>
    %24 = arith.mulf %22, %23 : vector<8x256xf32>
    %c16_i32_17 = arith.constant 16 : i32
    %25 = tpu.dynamic_rotate %3 by %c16_i32_17 dim 1 : vector<1x256xf32>, i32 -> vector<1x256xf32>
    %26 = arith.mulf %25, %21 : vector<1x256xf32>
    %c1_18 = arith.constant 1 : index
    %c0_19 = arith.constant 0 : index
    %c0_20 = arith.constant 0 : index
    %27 = vector.load %arg3[%c1_18, %c0_19, %c0_20] : memref<9x8x8xf32, #tpu.memory_space<vmem>>, vector<1x8x8xf32>
    %28 = vector.shape_cast %27 : vector<1x8x8xf32> to vector<8x8xf32>
    %cst_21 = arith.constant dense<0.000000e+00> : vector<8x256xf32>
    %29 = tpu.matmul %28, %24, %cst_21 {dimension_numbers = #tpu.dot_dimension_numbers<[1], [0], [0], [1], [0, 0, 1, 1], [], []>} : vector<8x8xf32>, vector<8x256xf32>, vector<8x256xf32> -> vector<8x256xf32>
    %c1_22 = arith.constant 1 : index
    %c0_23 = arith.constant 0 : index
    %c0_24 = arith.constant 0 : index
    %30 = vector.load %arg4[%c1_22, %c0_23, %c0_24] : memref<9x8x1xf32, #tpu.memory_space<vmem>>, vector<1x8x1xf32>
    %31 = vector.shape_cast %30 : vector<1x8x1xf32> to vector<8x1xf32>
    %32 = vector.broadcast %31 : vector<8x1xf32> to vector<8x256xf32>
    %33 = vector.broadcast %26 : vector<1x256xf32> to vector<8x256xf32>
    %34 = arith.mulf %32, %33 : vector<8x256xf32>
    %35 = arith.addf %29, %34 : vector<8x256xf32>
    %36 = arith.addf %19, %35 : vector<8x256xf32>
    %c2 = arith.constant 2 : index
    %c0_25 = arith.constant 0 : index
    %c0_26 = arith.constant 0 : index
    %37 = vector.load %arg8[%c2, %c0_25, %c0_26] : memref<9x1x256xf32, #tpu.memory_space<vmem>>, vector<1x1x256xf32>
    %38 = vector.shape_cast %37 : vector<1x1x256xf32> to vector<1x256xf32>
    %c15_i32 = arith.constant 15 : i32
    %39 = tpu.dynamic_rotate %1 by %c15_i32 dim 1 : vector<8x256xf32>, i32 -> vector<8x256xf32>
    %40 = vector.broadcast %38 : vector<1x256xf32> to vector<8x256xf32>
    %41 = arith.mulf %39, %40 : vector<8x256xf32>
    %c15_i32_27 = arith.constant 15 : i32
    %42 = tpu.dynamic_rotate %3 by %c15_i32_27 dim 1 : vector<1x256xf32>, i32 -> vector<1x256xf32>
    %43 = arith.mulf %42, %38 : vector<1x256xf32>
    %c2_28 = arith.constant 2 : index
    %c0_29 = arith.constant 0 : index
    %c0_30 = arith.constant 0 : index
    %44 = vector.load %arg3[%c2_28, %c0_29, %c0_30] : memref<9x8x8xf32, #tpu.memory_space<vmem>>, vector<1x8x8xf32>
    %45 = vector.shape_cast %44 : vector<1x8x8xf32> to vector<8x8xf32>
    %cst_31 = arith.constant dense<0.000000e+00> : vector<8x256xf32>
    %46 = tpu.matmul %45, %41, %cst_31 {dimension_numbers = #tpu.dot_dimension_numbers<[1], [0], [0], [1], [0, 0, 1, 1], [], []>} : vector<8x8xf32>, vector<8x256xf32>, vector<8x256xf32> -> vector<8x256xf32>
    %c2_32 = arith.constant 2 : index
    %c0_33 = arith.constant 0 : index
    %c0_34 = arith.constant 0 : index
    %47 = vector.load %arg4[%c2_32, %c0_33, %c0_34] : memref<9x8x1xf32, #tpu.memory_space<vmem>>, vector<1x8x1xf32>
    %48 = vector.shape_cast %47 : vector<1x8x1xf32> to vector<8x1xf32>
    %49 = vector.broadcast %48 : vector<8x1xf32> to vector<8x256xf32>
    %50 = vector.broadcast %43 : vector<1x256xf32> to vector<8x256xf32>
    %51 = arith.mulf %49, %50 : vector<8x256xf32>
    %52 = arith.addf %46, %51 : vector<8x256xf32>
    %53 = arith.addf %36, %52 : vector<8x256xf32>
    %c3 = arith.constant 3 : index
    %c0_35 = arith.constant 0 : index
    %c0_36 = arith.constant 0 : index
    %54 = vector.load %arg8[%c3, %c0_35, %c0_36] : memref<9x1x256xf32, #tpu.memory_space<vmem>>, vector<1x1x256xf32>
    %55 = vector.shape_cast %54 : vector<1x1x256xf32> to vector<1x256xf32>
    %c1_i32 = arith.constant 1 : i32
    %56 = tpu.dynamic_rotate %1 by %c1_i32 dim 1 : vector<8x256xf32>, i32 -> vector<8x256xf32>
    %57 = vector.broadcast %55 : vector<1x256xf32> to vector<8x256xf32>
    %58 = arith.mulf %56, %57 : vector<8x256xf32>
    %c1_i32_37 = arith.constant 1 : i32
    %59 = tpu.dynamic_rotate %3 by %c1_i32_37 dim 1 : vector<1x256xf32>, i32 -> vector<1x256xf32>
    %60 = arith.mulf %59, %55 : vector<1x256xf32>
    %c3_38 = arith.constant 3 : index
    %c0_39 = arith.constant 0 : index
    %c0_40 = arith.constant 0 : index
    %61 = vector.load %arg3[%c3_38, %c0_39, %c0_40] : memref<9x8x8xf32, #tpu.memory_space<vmem>>, vector<1x8x8xf32>
    %62 = vector.shape_cast %61 : vector<1x8x8xf32> to vector<8x8xf32>
    %cst_41 = arith.constant dense<0.000000e+00> : vector<8x256xf32>
    %63 = tpu.matmul %62, %58, %cst_41 {dimension_numbers = #tpu.dot_dimension_numbers<[1], [0], [0], [1], [0, 0, 1, 1], [], []>} : vector<8x8xf32>, vector<8x256xf32>, vector<8x256xf32> -> vector<8x256xf32>
    %c3_42 = arith.constant 3 : index
    %c0_43 = arith.constant 0 : index
    %c0_44 = arith.constant 0 : index
    %64 = vector.load %arg4[%c3_42, %c0_43, %c0_44] : memref<9x8x1xf32, #tpu.memory_space<vmem>>, vector<1x8x1xf32>
    %65 = vector.shape_cast %64 : vector<1x8x1xf32> to vector<8x1xf32>
    %66 = vector.broadcast %65 : vector<8x1xf32> to vector<8x256xf32>
    %67 = vector.broadcast %60 : vector<1x256xf32> to vector<8x256xf32>
    %68 = arith.mulf %66, %67 : vector<8x256xf32>
    %69 = arith.addf %63, %68 : vector<8x256xf32>
    %70 = arith.addf %53, %69 : vector<8x256xf32>
    %c4 = arith.constant 4 : index
    %c0_45 = arith.constant 0 : index
    %c0_46 = arith.constant 0 : index
    %71 = vector.load %arg3[%c4, %c0_45, %c0_46] : memref<9x8x8xf32, #tpu.memory_space<vmem>>, vector<1x8x8xf32>
    %72 = vector.shape_cast %71 : vector<1x8x8xf32> to vector<8x8xf32>
    %cst_47 = arith.constant dense<0.000000e+00> : vector<8x256xf32>
    %73 = tpu.matmul %72, %1, %cst_47 {dimension_numbers = #tpu.dot_dimension_numbers<[1], [0], [0], [1], [0, 0, 1, 1], [], []>} : vector<8x8xf32>, vector<8x256xf32>, vector<8x256xf32> -> vector<8x256xf32>
    %c4_48 = arith.constant 4 : index
    %c0_49 = arith.constant 0 : index
    %c0_50 = arith.constant 0 : index
    %74 = vector.load %arg4[%c4_48, %c0_49, %c0_50] : memref<9x8x1xf32, #tpu.memory_space<vmem>>, vector<1x8x1xf32>
    %75 = vector.shape_cast %74 : vector<1x8x1xf32> to vector<8x1xf32>
    %76 = vector.broadcast %75 : vector<8x1xf32> to vector<8x256xf32>
    %77 = vector.broadcast %3 : vector<1x256xf32> to vector<8x256xf32>
    %78 = arith.mulf %76, %77 : vector<8x256xf32>
    %79 = arith.addf %73, %78 : vector<8x256xf32>
    %80 = arith.addf %70, %79 : vector<8x256xf32>
    %c5 = arith.constant 5 : index
    %c0_51 = arith.constant 0 : index
    %c0_52 = arith.constant 0 : index
    %81 = vector.load %arg8[%c5, %c0_51, %c0_52] : memref<9x1x256xf32, #tpu.memory_space<vmem>>, vector<1x1x256xf32>
    %82 = vector.shape_cast %81 : vector<1x1x256xf32> to vector<1x256xf32>
    %c255_i32 = arith.constant 255 : i32
    %83 = tpu.dynamic_rotate %1 by %c255_i32 dim 1 : vector<8x256xf32>, i32 -> vector<8x256xf32>
    %84 = vector.broadcast %82 : vector<1x256xf32> to vector<8x256xf32>
    %85 = arith.mulf %83, %84 : vector<8x256xf32>
    %c255_i32_53 = arith.constant 255 : i32
    %86 = tpu.dynamic_rotate %3 by %c255_i32_53 dim 1 : vector<1x256xf32>, i32 -> vector<1x256xf32>
    %87 = arith.mulf %86, %82 : vector<1x256xf32>
    %c5_54 = arith.constant 5 : index
    %c0_55 = arith.constant 0 : index
    %c0_56 = arith.constant 0 : index
    %88 = vector.load %arg3[%c5_54, %c0_55, %c0_56] : memref<9x8x8xf32, #tpu.memory_space<vmem>>, vector<1x8x8xf32>
    %89 = vector.shape_cast %88 : vector<1x8x8xf32> to vector<8x8xf32>
    %cst_57 = arith.constant dense<0.000000e+00> : vector<8x256xf32>
    %90 = tpu.matmul %89, %85, %cst_57 {dimension_numbers = #tpu.dot_dimension_numbers<[1], [0], [0], [1], [0, 0, 1, 1], [], []>} : vector<8x8xf32>, vector<8x256xf32>, vector<8x256xf32> -> vector<8x256xf32>
    %c5_58 = arith.constant 5 : index
    %c0_59 = arith.constant 0 : index
    %c0_60 = arith.constant 0 : index
    %91 = vector.load %arg4[%c5_58, %c0_59, %c0_60] : memref<9x8x1xf32, #tpu.memory_space<vmem>>, vector<1x8x1xf32>
    %92 = vector.shape_cast %91 : vector<1x8x1xf32> to vector<8x1xf32>
    %93 = vector.broadcast %92 : vector<8x1xf32> to vector<8x256xf32>
    %94 = vector.broadcast %87 : vector<1x256xf32> to vector<8x256xf32>
    %95 = arith.mulf %93, %94 : vector<8x256xf32>
    %96 = arith.addf %90, %95 : vector<8x256xf32>
    %97 = arith.addf %80, %96 : vector<8x256xf32>
    %c6 = arith.constant 6 : index
    %c0_61 = arith.constant 0 : index
    %c0_62 = arith.constant 0 : index
    %98 = vector.load %arg8[%c6, %c0_61, %c0_62] : memref<9x1x256xf32, #tpu.memory_space<vmem>>, vector<1x1x256xf32>
    %99 = vector.shape_cast %98 : vector<1x1x256xf32> to vector<1x256xf32>
    %c241_i32 = arith.constant 241 : i32
    %100 = tpu.dynamic_rotate %1 by %c241_i32 dim 1 : vector<8x256xf32>, i32 -> vector<8x256xf32>
    %101 = vector.broadcast %99 : vector<1x256xf32> to vector<8x256xf32>
    %102 = arith.mulf %100, %101 : vector<8x256xf32>
    %c241_i32_63 = arith.constant 241 : i32
    %103 = tpu.dynamic_rotate %3 by %c241_i32_63 dim 1 : vector<1x256xf32>, i32 -> vector<1x256xf32>
    %104 = arith.mulf %103, %99 : vector<1x256xf32>
    %c6_64 = arith.constant 6 : index
    %c0_65 = arith.constant 0 : index
    %c0_66 = arith.constant 0 : index
    %105 = vector.load %arg3[%c6_64, %c0_65, %c0_66] : memref<9x8x8xf32, #tpu.memory_space<vmem>>, vector<1x8x8xf32>
    %106 = vector.shape_cast %105 : vector<1x8x8xf32> to vector<8x8xf32>
    %cst_67 = arith.constant dense<0.000000e+00> : vector<8x256xf32>
    %107 = tpu.matmul %106, %102, %cst_67 {dimension_numbers = #tpu.dot_dimension_numbers<[1], [0], [0], [1], [0, 0, 1, 1], [], []>} : vector<8x8xf32>, vector<8x256xf32>, vector<8x256xf32> -> vector<8x256xf32>
    %c6_68 = arith.constant 6 : index
    %c0_69 = arith.constant 0 : index
    %c0_70 = arith.constant 0 : index
    %108 = vector.load %arg4[%c6_68, %c0_69, %c0_70] : memref<9x8x1xf32, #tpu.memory_space<vmem>>, vector<1x8x1xf32>
    %109 = vector.shape_cast %108 : vector<1x8x1xf32> to vector<8x1xf32>
    %110 = vector.broadcast %109 : vector<8x1xf32> to vector<8x256xf32>
    %111 = vector.broadcast %104 : vector<1x256xf32> to vector<8x256xf32>
    %112 = arith.mulf %110, %111 : vector<8x256xf32>
    %113 = arith.addf %107, %112 : vector<8x256xf32>
    %114 = arith.addf %97, %113 : vector<8x256xf32>
    %c7 = arith.constant 7 : index
    %c0_71 = arith.constant 0 : index
    %c0_72 = arith.constant 0 : index
    %115 = vector.load %arg8[%c7, %c0_71, %c0_72] : memref<9x1x256xf32, #tpu.memory_space<vmem>>, vector<1x1x256xf32>
    %116 = vector.shape_cast %115 : vector<1x1x256xf32> to vector<1x256xf32>
    %c240_i32 = arith.constant 240 : i32
    %117 = tpu.dynamic_rotate %1 by %c240_i32 dim 1 : vector<8x256xf32>, i32 -> vector<8x256xf32>
    %118 = vector.broadcast %116 : vector<1x256xf32> to vector<8x256xf32>
    %119 = arith.mulf %117, %118 : vector<8x256xf32>
    %c240_i32_73 = arith.constant 240 : i32
    %120 = tpu.dynamic_rotate %3 by %c240_i32_73 dim 1 : vector<1x256xf32>, i32 -> vector<1x256xf32>
    %121 = arith.mulf %120, %116 : vector<1x256xf32>
    %c7_74 = arith.constant 7 : index
    %c0_75 = arith.constant 0 : index
    %c0_76 = arith.constant 0 : index
    %122 = vector.load %arg3[%c7_74, %c0_75, %c0_76] : memref<9x8x8xf32, #tpu.memory_space<vmem>>, vector<1x8x8xf32>
    %123 = vector.shape_cast %122 : vector<1x8x8xf32> to vector<8x8xf32>
    %cst_77 = arith.constant dense<0.000000e+00> : vector<8x256xf32>
    %124 = tpu.matmul %123, %119, %cst_77 {dimension_numbers = #tpu.dot_dimension_numbers<[1], [0], [0], [1], [0, 0, 1, 1], [], []>} : vector<8x8xf32>, vector<8x256xf32>, vector<8x256xf32> -> vector<8x256xf32>
    %c7_78 = arith.constant 7 : index
    %c0_79 = arith.constant 0 : index
    %c0_80 = arith.constant 0 : index
    %125 = vector.load %arg4[%c7_78, %c0_79, %c0_80] : memref<9x8x1xf32, #tpu.memory_space<vmem>>, vector<1x8x1xf32>
    %126 = vector.shape_cast %125 : vector<1x8x1xf32> to vector<8x1xf32>
    %127 = vector.broadcast %126 : vector<8x1xf32> to vector<8x256xf32>
    %128 = vector.broadcast %121 : vector<1x256xf32> to vector<8x256xf32>
    %129 = arith.mulf %127, %128 : vector<8x256xf32>
    %130 = arith.addf %124, %129 : vector<8x256xf32>
    %131 = arith.addf %114, %130 : vector<8x256xf32>
    %c8 = arith.constant 8 : index
    %c0_81 = arith.constant 0 : index
    %c0_82 = arith.constant 0 : index
    %132 = vector.load %arg8[%c8, %c0_81, %c0_82] : memref<9x1x256xf32, #tpu.memory_space<vmem>>, vector<1x1x256xf32>
    %133 = vector.shape_cast %132 : vector<1x1x256xf32> to vector<1x256xf32>
    %c239_i32 = arith.constant 239 : i32
    %134 = tpu.dynamic_rotate %1 by %c239_i32 dim 1 : vector<8x256xf32>, i32 -> vector<8x256xf32>
    %135 = vector.broadcast %133 : vector<1x256xf32> to vector<8x256xf32>
    %136 = arith.mulf %134, %135 : vector<8x256xf32>
    %c239_i32_83 = arith.constant 239 : i32
    %137 = tpu.dynamic_rotate %3 by %c239_i32_83 dim 1 : vector<1x256xf32>, i32 -> vector<1x256xf32>
    %138 = arith.mulf %137, %133 : vector<1x256xf32>
    %c8_84 = arith.constant 8 : index
    %c0_85 = arith.constant 0 : index
    %c0_86 = arith.constant 0 : index
    %139 = vector.load %arg3[%c8_84, %c0_85, %c0_86] : memref<9x8x8xf32, #tpu.memory_space<vmem>>, vector<1x8x8xf32>
    %140 = vector.shape_cast %139 : vector<1x8x8xf32> to vector<8x8xf32>
    %cst_87 = arith.constant dense<0.000000e+00> : vector<8x256xf32>
    %141 = tpu.matmul %140, %136, %cst_87 {dimension_numbers = #tpu.dot_dimension_numbers<[1], [0], [0], [1], [0, 0, 1, 1], [], []>} : vector<8x8xf32>, vector<8x256xf32>, vector<8x256xf32> -> vector<8x256xf32>
    %c8_88 = arith.constant 8 : index
    %c0_89 = arith.constant 0 : index
    %c0_90 = arith.constant 0 : index
    %142 = vector.load %arg4[%c8_88, %c0_89, %c0_90] : memref<9x8x1xf32, #tpu.memory_space<vmem>>, vector<1x8x1xf32>
    %143 = vector.shape_cast %142 : vector<1x8x1xf32> to vector<8x1xf32>
    %144 = vector.broadcast %143 : vector<8x1xf32> to vector<8x256xf32>
    %145 = vector.broadcast %138 : vector<1x256xf32> to vector<8x256xf32>
    %146 = arith.mulf %144, %145 : vector<8x256xf32>
    %147 = arith.addf %141, %146 : vector<8x256xf32>
    %148 = arith.addf %131, %147 : vector<8x256xf32>
    %c0_91 = arith.constant 0 : index
    %c0_92 = arith.constant 0 : index
    %149 = vector.load %arg5[%c0_91, %c0_92] : memref<8x1xf32, #tpu.memory_space<vmem>>, vector<8x1xf32>
    %150 = vector.broadcast %149 : vector<8x1xf32> to vector<8x256xf32>
    %151 = arith.addf %148, %150 : vector<8x256xf32>
    %cst_93 = arith.constant 0.000000e+00 : f32
    %152 = vector.broadcast %cst_93 : f32 to vector<8x256xf32>
    %153 = arith.maximumf %151, %152 : vector<8x256xf32>
    %154 = arith.addf %1, %153 : vector<8x256xf32>
    %c0_94 = arith.constant 0 : index
    %c0_95 = arith.constant 0 : index
    %c0_96 = arith.constant 0 : index
    %155 = vector.load %arg9[%c0_94, %c0_95, %c0_96] : memref<1x8x256xf32, #tpu.memory_space<vmem>>, vector<1x8x256xf32>
    %156 = vector.shape_cast %155 : vector<1x8x256xf32> to vector<8x256xf32>
    %157 = vector.shape_cast %154 : vector<8x256xf32> to vector<1x8x256xf32>
    tpu.vector_store %arg9[%c0_94, %c0_95, %c0_96], %157 {strides = array<i32>} : memref<1x8x256xf32, #tpu.memory_space<vmem>>, vector<1x8x256xf32>,
    %c0_97 = arith.constant 0 : index
    %c0_98 = arith.constant 0 : index
    %158 = vector.load %arg6[%c0_97, %c0_98] : memref<9x8xf32, #tpu.memory_space<vmem>>, vector<9x8xf32>
    %cst_99 = arith.constant dense<0.000000e+00> : vector<9x256xf32>
    %159 = tpu.matmul %158, %154, %cst_99 {dimension_numbers = #tpu.dot_dimension_numbers<[1], [0], [0], [1], [0, 0, 1, 1], [], []>} : vector<9x8xf32>, vector<8x256xf32>, vector<9x256xf32> -> vector<9x256xf32>
    %160 = vector.extract_strided_slice %159 {offsets = [0, 0], sizes = [1, 256], strides = [1, 1]} : vector<9x256xf32> to vector<1x256xf32>
    %c17_i32_100 = arith.constant 17 : i32
    %161 = tpu.dynamic_rotate %160 by %c17_i32_100 dim 1 : vector<1x256xf32>, i32 -> vector<1x256xf32>
    %c0_101 = arith.constant 0 : index
    %c0_102 = arith.constant 0 : index
    %c0_103 = arith.constant 0 : index
    %162 = vector.load %arg8[%c0_101, %c0_102, %c0_103] : memref<9x1x256xf32, #tpu.memory_space<vmem>>, vector<1x1x256xf32>
    %163 = vector.shape_cast %162 : vector<1x1x256xf32> to vector<1x256xf32>
    %164 = arith.mulf %161, %163 : vector<1x256xf32>
    %165 = vector.extract_strided_slice %159 {offsets = [1, 0], sizes = [1, 256], strides = [1, 1]} : vector<9x256xf32> to vector<1x256xf32>
    %c16_i32_104 = arith.constant 16 : i32
    %166 = tpu.dynamic_rotate %165 by %c16_i32_104 dim 1 : vector<1x256xf32>, i32 -> vector<1x256xf32>
    %c1_105 = arith.constant 1 : index
    %c0_106 = arith.constant 0 : index
    %c0_107 = arith.constant 0 : index
    %167 = vector.load %arg8[%c1_105, %c0_106, %c0_107] : memref<9x1x256xf32, #tpu.memory_space<vmem>>, vector<1x1x256xf32>
    %168 = vector.shape_cast %167 : vector<1x1x256xf32> to vector<1x256xf32>
    %169 = arith.mulf %166, %168 : vector<1x256xf32>
    %170 = arith.addf %164, %169 : vector<1x256xf32>
    %171 = vector.extract_strided_slice %159 {offsets = [2, 0], sizes = [1, 256], strides = [1, 1]} : vector<9x256xf32> to vector<1x256xf32>
    %c15_i32_108 = arith.constant 15 : i32
    %172 = tpu.dynamic_rotate %171 by %c15_i32_108 dim 1 : vector<1x256xf32>, i32 -> vector<1x256xf32>
    %c2_109 = arith.constant 2 : index
    %c0_110 = arith.constant 0 : index
    %c0_111 = arith.constant 0 : index
    %173 = vector.load %arg8[%c2_109, %c0_110, %c0_111] : memref<9x1x256xf32, #tpu.memory_space<vmem>>, vector<1x1x256xf32>
    %174 = vector.shape_cast %173 : vector<1x1x256xf32> to vector<1x256xf32>
    %175 = arith.mulf %172, %174 : vector<1x256xf32>
    %176 = arith.addf %170, %175 : vector<1x256xf32>
    %177 = vector.extract_strided_slice %159 {offsets = [3, 0], sizes = [1, 256], strides = [1, 1]} : vector<9x256xf32> to vector<1x256xf32>
    %c1_i32_112 = arith.constant 1 : i32
    %178 = tpu.dynamic_rotate %177 by %c1_i32_112 dim 1 : vector<1x256xf32>, i32 -> vector<1x256xf32>
    %c3_113 = arith.constant 3 : index
    %c0_114 = arith.constant 0 : index
    %c0_115 = arith.constant 0 : index
    %179 = vector.load %arg8[%c3_113, %c0_114, %c0_115] : memref<9x1x256xf32, #tpu.memory_space<vmem>>, vector<1x1x256xf32>
    %180 = vector.shape_cast %179 : vector<1x1x256xf32> to vector<1x256xf32>
    %181 = arith.mulf %178, %180 : vector<1x256xf32>
    %182 = arith.addf %176, %181 : vector<1x256xf32>
    %183 = vector.extract_strided_slice %159 {offsets = [4, 0], sizes = [1, 256], strides = [1, 1]} : vector<9x256xf32> to vector<1x256xf32>
    %184 = arith.addf %182, %183 : vector<1x256xf32>
    %185 = vector.extract_strided_slice %159 {offsets = [5, 0], sizes = [1, 256], strides = [1, 1]} : vector<9x256xf32> to vector<1x256xf32>
    %c255_i32_116 = arith.constant 255 : i32
    %186 = tpu.dynamic_rotate %185 by %c255_i32_116 dim 1 : vector<1x256xf32>, i32 -> vector<1x256xf32>
    %c5_117 = arith.constant 5 : index
    %c0_118 = arith.constant 0 : index
    %c0_119 = arith.constant 0 : index
    %187 = vector.load %arg8[%c5_117, %c0_118, %c0_119] : memref<9x1x256xf32, #tpu.memory_space<vmem>>, vector<1x1x256xf32>
    %188 = vector.shape_cast %187 : vector<1x1x256xf32> to vector<1x256xf32>
    %189 = arith.mulf %186, %188 : vector<1x256xf32>
    %190 = arith.addf %184, %189 : vector<1x256xf32>
    %191 = vector.extract_strided_slice %159 {offsets = [6, 0], sizes = [1, 256], strides = [1, 1]} : vector<9x256xf32> to vector<1x256xf32>
    %c241_i32_120 = arith.constant 241 : i32
    %192 = tpu.dynamic_rotate %191 by %c241_i32_120 dim 1 : vector<1x256xf32>, i32 -> vector<1x256xf32>
    %c6_121 = arith.constant 6 : index
    %c0_122 = arith.constant 0 : index
    %c0_123 = arith.constant 0 : index
    %193 = vector.load %arg8[%c6_121, %c0_122, %c0_123] : memref<9x1x256xf32, #tpu.memory_space<vmem>>, vector<1x1x256xf32>
    %194 = vector.shape_cast %193 : vector<1x1x256xf32> to vector<1x256xf32>
    %195 = arith.mulf %192, %194 : vector<1x256xf32>
    %196 = arith.addf %190, %195 : vector<1x256xf32>
    %197 = vector.extract_strided_slice %159 {offsets = [7, 0], sizes = [1, 256], strides = [1, 1]} : vector<9x256xf32> to vector<1x256xf32>
    %c240_i32_124 = arith.constant 240 : i32
    %198 = tpu.dynamic_rotate %197 by %c240_i32_124 dim 1 : vector<1x256xf32>, i32 -> vector<1x256xf32>
    %c7_125 = arith.constant 7 : index
    %c0_126 = arith.constant 0 : index
    %c0_127 = arith.constant 0 : index
    %199 = vector.load %arg8[%c7_125, %c0_126, %c0_127] : memref<9x1x256xf32, #tpu.memory_space<vmem>>, vector<1x1x256xf32>
    %200 = vector.shape_cast %199 : vector<1x1x256xf32> to vector<1x256xf32>
    %201 = arith.mulf %198, %200 : vector<1x256xf32>
    %202 = arith.addf %196, %201 : vector<1x256xf32>
    %203 = vector.extract_strided_slice %159 {offsets = [8, 0], sizes = [1, 256], strides = [1, 1]} : vector<9x256xf32> to vector<1x256xf32>
    %c239_i32_128 = arith.constant 239 : i32
    %204 = tpu.dynamic_rotate %203 by %c239_i32_128 dim 1 : vector<1x256xf32>, i32 -> vector<1x256xf32>
    %c8_129 = arith.constant 8 : index
    %c0_130 = arith.constant 0 : index
    %c0_131 = arith.constant 0 : index
    %205 = vector.load %arg8[%c8_129, %c0_130, %c0_131] : memref<9x1x256xf32, #tpu.memory_space<vmem>>, vector<1x1x256xf32>
    %206 = vector.shape_cast %205 : vector<1x1x256xf32> to vector<1x256xf32>
    %207 = arith.mulf %204, %206 : vector<1x256xf32>
    %208 = arith.addf %202, %207 : vector<1x256xf32>
    %209 = arith.addf %3, %208 : vector<1x256xf32>
    %c0_132 = arith.constant 0 : index
    %c0_133 = arith.constant 0 : index
    %210 = vector.load %arg7[%c0_132, %c0_133] : memref<1x1xf32, #tpu.memory_space<vmem>>, vector<1x1xf32>
    %211 = vector.broadcast %210 : vector<1x1xf32> to vector<1x256xf32>
    %212 = arith.addf %209, %211 : vector<1x256xf32>
    %c0_134 = arith.constant 0 : index
    %c0_135 = arith.constant 0 : index
    %c0_136 = arith.constant 0 : index
    %213 = vector.load %arg10[%c0_134, %c0_135, %c0_136] : memref<1x1x256xf32, #tpu.memory_space<vmem>>, vector<1x1x256xf32>
    %214 = vector.shape_cast %213 : vector<1x1x256xf32> to vector<1x256xf32>
    %215 = vector.shape_cast %212 : vector<1x256xf32> to vector<1x1x256xf32>
    tpu.vector_store %arg10[%c0_134, %c0_135, %c0_136], %215 {strides = array<i32>} : memref<1x1x256xf32, #tpu.memory_space<vmem>>, vector<1x1x256xf32>,
    return
  }
  func.func @transform_0(%arg0: i32) -> (i32, i32, i32) {
    %c0_i32 = arith.constant 0 : i32
    %c0_i32_0 = arith.constant 0 : i32
    %c0_i32_1 = arith.constant 0 : i32
    return %arg0, %c0_i32, %c0_i32_0 : i32, i32, i32
  }
  func.func @transform_1(%arg0: i32) -> (i32, i32, i32) {
    %c0_i32 = arith.constant 0 : i32
    %c0_i32_0 = arith.constant 0 : i32
    %c0_i32_1 = arith.constant 0 : i32
    return %arg0, %c0_i32, %c0_i32_0 : i32, i32, i32
  }
  func.func @transform_2(%arg0: i32) -> (i32, i32, i32) {
    %c0_i32 = arith.constant 0 : i32
    %c0_i32_0 = arith.constant 0 : i32
    %c0_i32_1 = arith.constant 0 : i32
    %c0_i32_2 = arith.constant 0 : i32
    return %c0_i32, %c0_i32_0, %c0_i32_1 : i32, i32, i32
  }
  func.func @transform_3(%arg0: i32) -> (i32, i32, i32) {
    %c0_i32 = arith.constant 0 : i32
    %c0_i32_0 = arith.constant 0 : i32
    %c0_i32_1 = arith.constant 0 : i32
    %c0_i32_2 = arith.constant 0 : i32
    return %c0_i32, %c0_i32_0, %c0_i32_1 : i32, i32, i32
  }
  func.func @transform_4(%arg0: i32) -> (i32, i32) {
    %c0_i32 = arith.constant 0 : i32
    %c0_i32_0 = arith.constant 0 : i32
    %c0_i32_1 = arith.constant 0 : i32
    return %c0_i32, %c0_i32_0 : i32, i32
  }
  func.func @transform_5(%arg0: i32) -> (i32, i32) {
    %c0_i32 = arith.constant 0 : i32
    %c0_i32_0 = arith.constant 0 : i32
    %c0_i32_1 = arith.constant 0 : i32
    return %c0_i32, %c0_i32_0 : i32, i32
  }
  func.func @transform_6(%arg0: i32) -> (i32, i32) {
    %c0_i32 = arith.constant 0 : i32
    %c0_i32_0 = arith.constant 0 : i32
    %c0_i32_1 = arith.constant 0 : i32
    return %c0_i32, %c0_i32_0 : i32, i32
  }
  func.func @transform_7(%arg0: i32) -> (i32, i32, i32) {
    %c0_i32 = arith.constant 0 : i32
    %c0_i32_0 = arith.constant 0 : i32
    %c0_i32_1 = arith.constant 0 : i32
    %c0_i32_2 = arith.constant 0 : i32
    return %c0_i32, %c0_i32_0, %c0_i32_1 : i32, i32, i32
  }
  func.func @transform_8(%arg0: i32) -> (i32, i32, i32) {
    %c0_i32 = arith.constant 0 : i32
    %c0_i32_0 = arith.constant 0 : i32
    %c0_i32_1 = arith.constant 0 : i32
    return %arg0, %c0_i32, %c0_i32_0 : i32, i32, i32
  }
  func.func @transform_9(%arg0: i32) -> (i32, i32, i32) {
    %c0_i32 = arith.constant 0 : i32
    %c0_i32_0 = arith.constant 0 : i32
    %c0_i32_1 = arith.constant 0 : i32
    return %arg0, %c0_i32, %c0_i32_0 : i32, i32, i32
  }
}

</mosaic_0001>

<llo_original>
// kernel: tpu_custom_call.1
$region0: #{tpu_custom_call.1}
  #allocation0 [shape = 'u32[]', space=smem, size = 0x4, offset = 0x4, fixed_abs, tag = 'smem constant byte address 0x4 - core index']
  #allocation1 [shape = 'u32[72,128]{1,0:T(1,128)}', space=vmem, size = 0x9000, scoped, tag = 'internal scratch']
  #allocation2 [shape = 'f32[1,1]{1,0:T(1,128)S(1)}', space=vmem, size = 0x200, scoped, tag = 'scoped memory for tpu_custom_call.1']
  %s0 = inlined_call_operand.vmem [shape: f32[2,8,256], index: 0, kind: input, shape index: {}]
  %s1 = inlined_call_operand.vmem [shape: f32[2,1,256], index: 1, kind: input, shape index: {}]
  %s2 = inlined_call_operand.vmem [shape: f32[9,8,8], index: 2, kind: input, shape index: {}]
  %s3 = inlined_call_operand.vmem [shape: f32[9,8,1], index: 3, kind: input, shape index: {}]
  %s4 = inlined_call_operand.vmem [shape: f32[8,1], index: 4, kind: input, shape index: {}]
  %s5 = inlined_call_operand.vmem [shape: f32[9,8], index: 5, kind: input, shape index: {}]
  %s6 = inlined_call_operand.<no memory space> [shape: f32[1,1], index: 6, kind: input, shape index: {}]
  %s7 = inlined_call_operand.vmem [shape: f32[9,1,256], index: 7, kind: input, shape index: {}]
  %s8 = inlined_call_operand.hbm [shape: f32[2,8,256], index: 8, kind: output, shape index: {0}]
  %s9 = inlined_call_operand.hbm [shape: f32[2,1,256], index: 9, kind: output, shape index: {1}]
  %10 = xla_tuple %s8, %s9
  %s11 = sld [smem:[#allocation0]]
  $region73: #{tpu_custom_call.1} parent=0
    _
  %s13 = ssub.s32 1, %s11
  %s14 = scalar_select 0, %s13, %s11
  %v15 = vstv %s6
  %16 = vst [vmem:[#allocation2] sm:$0x1] %v15
  $region1: #{tpu_custom_call.1} parent=0
    #allocation3 [shape = 'u8[16384]{0}', space=vmem, size = 0x4000, scoped, tag = 'output window, operand 0']
    #allocation4 [shape = 's32[2]{0}', space=sflag, size = 0x8, scoped, tag = 'scoped memory for tpu_custom_call.1']
    #allocation5 [shape = 'u8[2048]{0}', space=vmem, size = 0x800, scoped, tag = 'output window, operand 1']
    #allocation6 [shape = 's32[2]{0}', space=sflag, size = 0x8, scoped, tag = 'scoped memory for tpu_custom_call.1']
    %17 = vsyncpa [#allocation4], 0
    %s18 = scalar_lea.sflag [#allocation4], 1
    %19 = vsyncpa %s18, 0
    %20 = vsyncpa [#allocation6], 0
    %s21 = scalar_lea.sflag [#allocation6], 1
    %22 = vsyncpa %s21, 0
    loop: start=0, step=1, limit=4
    $region2: #{tpu_custom_call.1} parent=1 // loop_pre_header
      _
    $region3: #{tpu_custom_call.1} parent=1 // loop_header
      %s24 = sphi 0, %s28
      %p25 = scmp.ge.s32.totalorder %s24, 4
      %s34 = sphi 0, %s36
      %s37 = sphi 0, %s34
      %s38 = sphi 0, %s37
      %s54 = sphi 0, %s38
      %s60 = sphi 0, %s62
      %s63 = sphi 0, %s60
      %s64 = sphi 0, %s63
      %s80 = sphi 0, %s64
      %s84 = sphi 0, %s84
      %s86 = sphi 0, %s84
      %s87 = sphi 0, %s86
      %s101 = sphi 0, %s87
      %s105 = sphi 0, %s105
      %s107 = sphi 0, %s105
      %s108 = sphi 0, %s107
      %s122 = sphi 0, %s108
      %s126 = sphi 0, %s126
      %s128 = sphi 0, %s126
      %s129 = sphi 0, %s128
      %s143 = sphi 0, %s129
      %s147 = sphi 0, %s147
      %s149 = sphi 0, %s147
      %s150 = sphi 0, %s149
      %s164 = sphi 0, %s150
      %s168 = sphi 0, %s168
      %s170 = sphi 0, %s168
      %s171 = sphi 0, %s170
      %s185 = sphi 0, %s171
      %s189 = sphi 0, %s189
      %s191 = sphi 0, %s189
      %s192 = sphi 0, %s191
      %s206 = sphi 0, %s192
      %s212 = sphi 0, %s214
      %s215 = sphi 0, %s212
      %s216 = sphi 0, %s215
      %s232 = sphi 0, %s216
      %s238 = sphi 0, %s240
      %s241 = sphi 0, %s238
      %s242 = sphi 0, %s241
      %s258 = sphi 0, %s242
    $region4: #{tpu_custom_call.1} parent=1 // loop_header_branch
      %27 = sbr.rel (%p25) target = $region8
    $region5: #{tpu_custom_call.1} parent=1 // loop_body
      %s29 = ssub.s32 %s24, 1
      %s30 = ssub.s32 %s24, 2
      %s31 = sadd.s32 %s24, 1
      %s32 = ssub.s32 %s24, %s31
      %p33 = scmp.eq.s32.totalorder %s32, 0
      %s35 = sadd.s32 %s34, 1
      %s36 = scalar_select %p33, %s34, %s35
      %p39 = pneg %p33
      %p40 = scmp.eq.s32.totalorder %s24, 1
      %p41 = por %p39, %p40
      %p42 = scmp.ne.s32.totalorder %s34, %s37
      %p43 = scmp.eq.s32.totalorder %s24, 0
      %p44 = por %p42, %p43
      %p45 = scmp.ne.s32.totalorder %s34, %s37
      %p46 = scmp.eq.s32.totalorder %s29, 1
      %p47 = por %p45, %p46
      %p48 = scmp.ne.s32.totalorder %s37, %s38
      %p49 = scmp.eq.s32.totalorder %s29, 0
      %p50 = por %p48, %p49
      %p51 = scmp.ne.s32.totalorder %s37, %s38
      %p52 = scmp.eq.s32.totalorder %s30, 1
      %p53 = por %p51, %p52
      %p55 = scmp.ne.s32.totalorder %s38, %s54
      %p56 = scmp.eq.s32.totalorder %s30, 0
      %p57 = por %p55, %p56
      %s58 = ssub.s32 %s24, %s31
      %p59 = scmp.eq.s32.totalorder %s58, 0
      %s61 = sadd.s32 %s60, 1
      %s62 = scalar_select %p59, %s60, %s61
      %p65 = pneg %p59
      %p66 = scmp.eq.s32.totalorder %s24, 1
      %p67 = por %p65, %p66
      %p68 = scmp.ne.s32.totalorder %s60, %s63
      %p69 = scmp.eq.s32.totalorder %s24, 0
      %p70 = por %p68, %p69
      %p71 = scmp.ne.s32.totalorder %s60, %s63
      %p72 = scmp.eq.s32.totalorder %s29, 1
      %p73 = por %p71, %p72
      %p74 = scmp.ne.s32.totalorder %s63, %s64
      %p75 = scmp.eq.s32.totalorder %s29, 0
      %p76 = por %p74, %p75
      %p77 = scmp.ne.s32.totalorder %s63, %s64
      %p78 = scmp.eq.s32.totalorder %s30, 1
      %p79 = por %p77, %p78
      %p81 = scmp.ne.s32.totalorder %s64, %s80
      %p82 = scmp.eq.s32.totalorder %s30, 0
      %p83 = por %p81, %p82
      %s85 = sadd.s32 %s84, 1
      %p88 = scmp.eq.s32.totalorder %s24, 1
      %p89 = scmp.ne.s32.totalorder %s84, %s86
      %p90 = scmp.eq.s32.totalorder %s24, 0
      %p91 = por %p89, %p90
      %p92 = scmp.ne.s32.totalorder %s84, %s86
      %p93 = scmp.eq.s32.totalorder %s29, 1
      %p94 = por %p92, %p93
      %p95 = scmp.ne.s32.totalorder %s86, %s87
      %p96 = scmp.eq.s32.totalorder %s29, 0
      %p97 = por %p95, %p96
      %p98 = scmp.ne.s32.totalorder %s86, %s87
      %p99 = scmp.eq.s32.totalorder %s30, 1
      %p100 = por %p98, %p99
      %p102 = scmp.ne.s32.totalorder %s87, %s101
      %p103 = scmp.eq.s32.totalorder %s30, 0
      %p104 = por %p102, %p103
      %s106 = sadd.s32 %s105, 1
      %p109 = scmp.eq.s32.totalorder %s24, 1
      %p110 = scmp.ne.s32.totalorder %s105, %s107
      %p111 = scmp.eq.s32.totalorder %s24, 0
      %p112 = por %p110, %p111
      %p113 = scmp.ne.s32.totalorder %s105, %s107
      %p114 = scmp.eq.s32.totalorder %s29, 1
      %p115 = por %p113, %p114
      %p116 = scmp.ne.s32.totalorder %s107, %s108
      %p117 = scmp.eq.s32.totalorder %s29, 0
      %p118 = por %p116, %p117
      %p119 = scmp.ne.s32.totalorder %s107, %s108
      %p120 = scmp.eq.s32.totalorder %s30, 1
      %p121 = por %p119, %p120
      %p123 = scmp.ne.s32.totalorder %s108, %s122
      %p124 = scmp.eq.s32.totalorder %s30, 0
      %p125 = por %p123, %p124
      %s127 = sadd.s32 %s126, 1
      %p130 = scmp.eq.s32.totalorder %s24, 1
      %p131 = scmp.ne.s32.totalorder %s126, %s128
      %p132 = scmp.eq.s32.totalorder %s24, 0
      %p133 = por %p131, %p132
      %p134 = scmp.ne.s32.totalorder %s126, %s128
      %p135 = scmp.eq.s32.totalorder %s29, 1
      %p136 = por %p134, %p135
      %p137 = scmp.ne.s32.totalorder %s128, %s129
      %p138 = scmp.eq.s32.totalorder %s29, 0
      %p139 = por %p137, %p138
      %p140 = scmp.ne.s32.totalorder %s128, %s129
      %p141 = scmp.eq.s32.totalorder %s30, 1
      %p142 = por %p140, %p141
      %p144 = scmp.ne.s32.totalorder %s129, %s143
      %p145 = scmp.eq.s32.totalorder %s30, 0
      %p146 = por %p144, %p145
      %s148 = sadd.s32 %s147, 1
      %p151 = scmp.eq.s32.totalorder %s24, 1
      %p152 = scmp.ne.s32.totalorder %s147, %s149
      %p153 = scmp.eq.s32.totalorder %s24, 0
      %p154 = por %p152, %p153
      %p155 = scmp.ne.s32.totalorder %s147, %s149
      %p156 = scmp.eq.s32.totalorder %s29, 1
      %p157 = por %p155, %p156
      %p158 = scmp.ne.s32.totalorder %s149, %s150
      %p159 = scmp.eq.s32.totalorder %s29, 0
      %p160 = por %p158, %p159
      %p161 = scmp.ne.s32.totalorder %s149, %s150
      %p162 = scmp.eq.s32.totalorder %s30, 1
      %p163 = por %p161, %p162
      %p165 = scmp.ne.s32.totalorder %s150, %s164
      %p166 = scmp.eq.s32.totalorder %s30, 0
      %p167 = por %p165, %p166
      %s169 = sadd.s32 %s168, 1
      %p172 = scmp.eq.s32.totalorder %s24, 1
      %p173 = scmp.ne.s32.totalorder %s168, %s170
      %p174 = scmp.eq.s32.totalorder %s24, 0
      %p175 = por %p173, %p174
      %p176 = scmp.ne.s32.totalorder %s168, %s170
      %p177 = scmp.eq.s32.totalorder %s29, 1
      %p178 = por %p176, %p177
      %p179 = scmp.ne.s32.totalorder %s170, %s171
      %p180 = scmp.eq.s32.totalorder %s29, 0
      %p181 = por %p179, %p180
      %p182 = scmp.ne.s32.totalorder %s170, %s171
      %p183 = scmp.eq.s32.totalorder %s30, 1
      %p184 = por %p182, %p183
      %p186 = scmp.ne.s32.totalorder %s171, %s185
      %p187 = scmp.eq.s32.totalorder %s30, 0
      %p188 = por %p186, %p187
      %s190 = sadd.s32 %s189, 1
      %p193 = scmp.eq.s32.totalorder %s24, 1
      %p194 = scmp.ne.s32.totalorder %s189, %s191
      %p195 = scmp.eq.s32.totalorder %s24, 0
      %p196 = por %p194, %p195
      %p197 = scmp.ne.s32.totalorder %s189, %s191
      %p198 = scmp.eq.s32.totalorder %s29, 1
      %p199 = por %p197, %p198
      %p200 = scmp.ne.s32.totalorder %s191, %s192
      %p201 = scmp.eq.s32.totalorder %s29, 0
      %p202 = por %p200, %p201
      %p203 = scmp.ne.s32.totalorder %s191, %s192
      %p204 = scmp.eq.s32.totalorder %s30, 1
      %p205 = por %p203, %p204
      %p207 = scmp.ne.s32.totalorder %s192, %s206
      %p208 = scmp.eq.s32.totalorder %s30, 0
      %p209 = por %p207, %p208
      %s210 = ssub.s32 %s24, %s31
      %p211 = scmp.eq.s32.totalorder %s210, 0
      %s213 = sadd.s32 %s212, 1
      %s214 = scalar_select %p211, %s212, %s213
      %p217 = pneg %p211
      %p218 = scmp.eq.s32.totalorder %s24, 1
      %p219 = por %p217, %p218
      %p220 = scmp.ne.s32.totalorder %s212, %s215
      %p221 = scmp.eq.s32.totalorder %s24, 0
      %p222 = por %p220, %p221
      %p223 = scmp.ne.s32.totalorder %s212, %s215
      %p224 = scmp.eq.s32.totalorder %s29, 1
      %p225 = por %p223, %p224
      %p226 = scmp.ne.s32.totalorder %s215, %s216
      %p227 = scmp.eq.s32.totalorder %s29, 0
      %p228 = por %p226, %p227
      %p229 = scmp.ne.s32.totalorder %s215, %s216
      %p230 = scmp.eq.s32.totalorder %s30, 1
      %p231 = por %p229, %p230
      %p233 = scmp.ne.s32.totalorder %s216, %s232
      %p234 = scmp.eq.s32.totalorder %s30, 0
      %p235 = por %p233, %p234
      %s236 = ssub.s32 %s24, %s31
      %p237 = scmp.eq.s32.totalorder %s236, 0
      %s239 = sadd.s32 %s238, 1
      %s240 = scalar_select %p237, %s238, %s239
      %p243 = pneg %p237
      %p244 = scmp.eq.s32.totalorder %s24, 1
      %p245 = por %p243, %p244
      %p246 = scmp.ne.s32.totalorder %s238, %s241
      %p247 = scmp.eq.s32.totalorder %s24, 0
      %p248 = por %p246, %p247
      %p249 = scmp.ne.s32.totalorder %s238, %s241
      %p250 = scmp.eq.s32.totalorder %s29, 1
      %p251 = por %p249, %p250
      %p252 = scmp.ne.s32.totalorder %s241, %s242
      %p253 = scmp.eq.s32.totalorder %s29, 0
      %p254 = por %p252, %p253
      %p255 = scmp.ne.s32.totalorder %s241, %s242
      %p256 = scmp.eq.s32.totalorder %s30, 1
      %p257 = por %p255, %p256
      %p259 = scmp.ne.s32.totalorder %s242, %s258
      %p260 = scmp.eq.s32.totalorder %s30, 0
      %p261 = por %p259, %p260
      %p262 = scmp.le.s32.totalorder 1, %s24
      %p263 = scmp.lt.s32.totalorder %s24, 3
      %p264 = pnand %p262, %p263
      %p265 = pneg %p264
      // Predicated region
      $region9: #{tpu_custom_call.1} parent=5 // pred_check
        _
      $region10: #{tpu_custom_call.1} parent=5 // pred_check_branch
        %267 = sbr.rel (%p264) target = $region12
      $region11: #{tpu_custom_call.1} parent=5 // pred_region
        %s268 = ssub.s32 %s24, 1
        // Predicated region
        $region13: #{tpu_custom_call.1} parent=11 // pred_check
          %p269 = pneg %p97
        $region14: #{tpu_custom_call.1} parent=11 // pred_check_branch
          %271 = sbr.rel (%p269) target = $region16
        $region15: #{tpu_custom_call.1} parent=11 // pred_region
          _
        $region16: #{tpu_custom_call.1} parent=11 // pred_fallthru
          _
        // Predicated region
        $region17: #{tpu_custom_call.1} parent=11 // pred_check
          %p272 = pneg %p118
        $region18: #{tpu_custom_call.1} parent=11 // pred_check_branch
          %274 = sbr.rel (%p272) target = $region20
        $region19: #{tpu_custom_call.1} parent=11 // pred_region
          _
        $region20: #{tpu_custom_call.1} parent=11 // pred_fallthru
          _
        // Predicated region
        $region21: #{tpu_custom_call.1} parent=11 // pred_check
          %p275 = pneg %p139
        $region22: #{tpu_custom_call.1} parent=11 // pred_check_branch
          %277 = sbr.rel (%p275) target = $region24
        $region23: #{tpu_custom_call.1} parent=11 // pred_region
          _
        $region24: #{tpu_custom_call.1} parent=11 // pred_fallthru
          _
        // Predicated region
        $region25: #{tpu_custom_call.1} parent=11 // pred_check
          %p278 = pneg %p160
        $region26: #{tpu_custom_call.1} parent=11 // pred_check_branch
          %280 = sbr.rel (%p278) target = $region28
        $region27: #{tpu_custom_call.1} parent=11 // pred_region
          _
        $region28: #{tpu_custom_call.1} parent=11 // pred_fallthru
          _
        // Predicated region
        $region29: #{tpu_custom_call.1} parent=11 // pred_check
          %p281 = pneg %p181
        $region30: #{tpu_custom_call.1} parent=11 // pred_check_branch
          %283 = sbr.rel (%p281) target = $region32
        $region31: #{tpu_custom_call.1} parent=11 // pred_region
          _
        $region32: #{tpu_custom_call.1} parent=11 // pred_fallthru
          _
        // Predicated region
        $region33: #{tpu_custom_call.1} parent=11 // pred_check
          %p284 = pneg %p202
        $region34: #{tpu_custom_call.1} parent=11 // pred_check_branch
          %286 = sbr.rel (%p284) target = $region36
        $region35: #{tpu_custom_call.1} parent=11 // pred_region
          _
        $region36: #{tpu_custom_call.1} parent=11 // pred_fallthru
          _
      $region12: #{tpu_custom_call.1} parent=5 // pred_fallthru
        _
      %p287 = scmp.lt.s32.totalorder %s24, 2
      // Predicated region
      $region37: #{tpu_custom_call.1} parent=5 // pred_check
        %p288 = pneg %p287
      $region38: #{tpu_custom_call.1} parent=5 // pred_check_branch
        %290 = sbr.rel (%p288) target = $region40
      $region39: #{tpu_custom_call.1} parent=5 // pred_region
        // Predicated region
        $region41: #{tpu_custom_call.1} parent=39 // pred_check
          %p291 = pneg %p44
        $region42: #{tpu_custom_call.1} parent=39 // pred_check_branch
          %293 = sbr.rel (%p291) target = $region44
        $region43: #{tpu_custom_call.1} parent=39 // pred_region
          %p294 = scmp.lt.s32.totalorder %s24, 1
          %s295 = scalar_select %p294, %s24, 1
          %s296 = smul.addr %s295, 2
          %s297 = smul.addr %s296, 8
          %s298 = scalar_lea.vmem %s0, %s297
        $region44: #{tpu_custom_call.1} parent=39 // pred_fallthru
          _
        // Predicated region
        $region45: #{tpu_custom_call.1} parent=39 // pred_check
          %p299 = pneg %p70
        $region46: #{tpu_custom_call.1} parent=39 // pred_check_branch
          %301 = sbr.rel (%p299) target = $region48
        $region47: #{tpu_custom_call.1} parent=39 // pred_region
          %p302 = scmp.lt.s32.totalorder %s24, 1
          %s303 = scalar_select %p302, %s24, 1
          %s304 = smul.addr %s303, 2
          %s305 = scalar_lea.vmem %s1, %s304
        $region48: #{tpu_custom_call.1} parent=39 // pred_fallthru
          _
      $region40: #{tpu_custom_call.1} parent=5 // pred_fallthru
        _
      %p306 = scmp.le.s32.totalorder 1, %s24
      %p307 = scmp.lt.s32.totalorder %s24, 3
      %p308 = pnand %p306, %p307
      %p309 = pneg %p308
      // Predicated region
      $region49: #{tpu_custom_call.1} parent=5 // pred_check
        _
      $region50: #{tpu_custom_call.1} parent=5 // pred_check_branch
        %311 = sbr.rel (%p308) target = $region52
      $region51: #{tpu_custom_call.1} parent=5 // pred_region
        %s312 = ssub.s32 %s24, 1
        %p313 = scmp.lt.s32.totalorder %s29, 1
        %s314 = scalar_select %p313, %s29, 1
        %s315 = smul.addr %s314, 2
        %s316 = smul.addr %s315, 8
        %s317 = scalar_lea.vmem %s0, %s316
        %p318 = pneg %p50
        %p319 = pneg %p47
        %p320 = scmp.lt.s32.totalorder %s29, 1
        %s321 = scalar_select %p320, %s29, 1
        %s322 = smul.addr %s321, 2
        %s323 = scalar_lea.vmem %s1, %s322
        %p324 = pneg %p76
        %p325 = pneg %p73
        %p326 = pneg %p97
        %p327 = pneg %p94
        %p328 = pneg %p118
        %p329 = pneg %p115
        %p330 = pneg %p139
        %p331 = pneg %p136
        %p332 = pneg %p160
        %p333 = pneg %p157
        %p334 = pneg %p181
        %p335 = pneg %p178
        %p336 = pneg %p202
        %p337 = pneg %p199
        %p338 = pneg %p228
        %p339 = pneg %p225
        %s340 = sand.u32 %s215, 1
        %s341 = scalar_lea.sflag [#allocation4], %s340
        %s342 = sand.u32 %s215, 1
        %s343 = smul.addr %s342, 16
        %s344 = scalar_lea.vmem [#allocation3], %s343
        %p345 = pneg %p254
        %p346 = pneg %p251
        %s347 = sand.u32 %s241, 1
        %s348 = scalar_lea.sflag [#allocation6], %s347
        %s349 = sand.u32 %s241, 1
        %s350 = smul.addr %s349, 2
        %s351 = scalar_lea.vmem [#allocation5], %s350
        %p352 = scmp.lt.s32.totalorder %s29, 1
        %s353 = scalar_select %p352, %s29, 1
        %s354 = smul.addr %s353, 2
        %s355 = smul.addr %s354, 8
        %s356 = scalar_lea.vmem %s0, %s355
        %p357 = scmp.lt.s32.totalorder %s29, 1
        %s358 = scalar_select %p357, %s29, 1
        %s359 = smul.addr %s358, 2
        %s360 = scalar_lea.vmem %s1, %s359
        %v361 = vld [vmem:[%s356] sm:$0xff]
        %v362 = vld [vmem:[%s356 + $0x8] sm:$0xff]
        %v363 = vld [vmem:[%s360] sm:$0x3]
        %v364 = vld [vmem:[%s7] sm:$0x3]
        %365 = vrot.lane.b32.xlu0 %v361, 17
        %v366 = vpop.permute.xlu0 %365
        %367 = vrot.lane.b32.xlu0 %v362, 17
        %v368 = vpop.permute.xlu0 %367
        %v369 = vlaneseq
        %v370 = vand.u32 %v369, 127
        %vm371 = vcmp.lt.s32.totalorder %v370, 17
        %v372 = vsel %vm371, %v366, %v368
        %v373 = vsel %vm371, %v368, %v366
        %v375 = vperm.slane %v364, 0
        %v376 = vperm.slane %v364, 1
        %v379 = vmul.f32 %v373, %v375
        %v380 = vmul.f32 %v372, %v376
        %v382 = vperm.slane %v363, 0
        %v383 = vperm.slane %v363, 1
        %386 = vrot.lane.b32.xlu0 %v382, 17
        %v387 = vpop.permute.xlu0 %386
        %388 = vrot.lane.b32.xlu0 %v383, 17
        %v389 = vpop.permute.xlu0 %388
        %v390 = vsel %vm371, %v387, %v389
        %v391 = vsel %vm371, %v389, %v387
        %v392 = vmul.f32 %v391, %v375
        %v393 = vmul.f32 %v390, %v376
        %v394 = vld [vmem:[%s2] sm:$0xff]
        %v395 = vld [vmem:[%s3] sm:$0xff]
        %397 = vset.pattern.permute.xlu0 0
        %398 = vperm.xlu0 %397, %v395
        %v399 = vpop.permute.xlu0 %398
        %v401 = vperm.slane %v392, 0
        %v402 = vperm.slane %v393, 0
        %v403 = vmul.f32 %v399, %v401
        %v404 = vmul.f32 %v399, %v402
        %vm405 = vcmask 64512
        %v407 = vsel %vm405, %v394, 0
        %409 = vmatpush.msra.mxu0 0.0
        %410 = vmatpush.msra.mxu0 0.0
        %411 = vmatpush.msra.mxu0 0.0
        %412 = vmatpush.msra.mxu0 0.0
        %413 = vmatpush.msra.mxu0 0.0
        %414 = vmatpush.msra.mxu0 0.0
        %415 = vmatpush.msra.mxu0 0.0
        %416 = vmatpush.msra.mxu0 0.0
        %417 = vmatpush.msra.mxu0 0.0
        %418 = vmatpush.msra.mxu0 0.0
        %419 = vmatpush.msra.mxu0 0.0
        %420 = vmatpush.msra.mxu0 0.0
        %421 = vmatpush.msra.mxu0 0.0
        %422 = vmatpush.msra.mxu0 0.0
        %423 = vmatpush.msra.mxu0 0.0
        %424 = vmatpush.msra.mxu0 %v379
        %425 = vmatmul.f32.gmra.mxu0 %v407
        %v426 = vpop.f32.mrf.mxu0
        %v427 = vadd.f32 %v403, %v426
        %428 = vdwg.mxu0
        %429 = vmatpush.msra.mxu0 0.0
        %430 = vmatpush.msra.mxu0 0.0
        %431 = vmatpush.msra.mxu0 0.0
        %432 = vmatpush.msra.mxu0 0.0
        %433 = vmatpush.msra.mxu0 0.0
        %434 = vmatpush.msra.mxu0 0.0
        %435 = vmatpush.msra.mxu0 0.0
        %436 = vmatpush.msra.mxu0 0.0
        %437 = vmatpush.msra.mxu0 0.0
        %438 = vmatpush.msra.mxu0 0.0
        %439 = vmatpush.msra.mxu0 0.0
        %440 = vmatpush.msra.mxu0 0.0
        %441 = vmatpush.msra.mxu0 0.0
        %442 = vmatpush.msra.mxu0 0.0
        %443 = vmatpush.msra.mxu0 0.0
        %444 = vmatpush.msra.mxu0 %v380
        %445 = vmatmul.f32.gmra.mxu0 %v407
        %v446 = vpop.f32.mrf.mxu0
        %v447 = vadd.f32 %v404, %v446
        %448 = vdwg.mxu0
        %s449 = scalar_lea.vmem %s7, 2
        %v450 = vld [vmem:[%s449] sm:$0x3]
        %451 = vrot.lane.b32.xlu0 %v361, 16
        %v452 = vpop.permute.xlu0 %451
        %453 = vrot.lane.b32.xlu0 %v362, 16
        %v454 = vpop.permute.xlu0 %453
        %vm455 = vcmp.lt.s32.totalorder %v370, 16
        %v456 = vsel %vm455, %v452, %v454
        %v457 = vsel %vm455, %v454, %v452
        %v459 = vperm.slane %v450, 0
        %v460 = vperm.slane %v450, 1
        %v463 = vmul.f32 %v457, %v459
        %v464 = vmul.f32 %v456, %v460
        %465 = vrot.lane.b32.xlu0 %v382, 16
        %v466 = vpop.permute.xlu0 %465
        %467 = vrot.lane.b32.xlu0 %v383, 16
        %v468 = vpop.permute.xlu0 %467
        %v469 = vsel %vm455, %v466, %v468
        %v470 = vsel %vm455, %v468, %v466
        %v471 = vmul.f32 %v470, %v459
        %v472 = vmul.f32 %v469, %v460
        %s473 = scalar_lea.vmem %s2, 8
        %v474 = vld [vmem:[%s473] sm:$0xff]
        %s475 = scalar_lea.vmem %s3, 8
        %v476 = vld [vmem:[%s475] sm:$0xff]
        %478 = vset.pattern.permute.xlu0 0
        %479 = vperm.xlu0 %478, %v476
        %v480 = vpop.permute.xlu0 %479
        %v482 = vperm.slane %v471, 0
        %v483 = vperm.slane %v472, 0
        %v484 = vmul.f32 %v480, %v482
        %v485 = vmul.f32 %v480, %v483
        %v487 = vsel %vm405, %v474, 0
        %489 = vmatpush.msra.mxu0 0.0
        %490 = vmatpush.msra.mxu0 0.0
        %491 = vmatpush.msra.mxu0 0.0
        %492 = vmatpush.msra.mxu0 0.0
        %493 = vmatpush.msra.mxu0 0.0
        %494 = vmatpush.msra.mxu0 0.0
        %495 = vmatpush.msra.mxu0 0.0
        %496 = vmatpush.msra.mxu0 0.0
        %497 = vmatpush.msra.mxu0 0.0
        %498 = vmatpush.msra.mxu0 0.0
        %499 = vmatpush.msra.mxu0 0.0
        %500 = vmatpush.msra.mxu0 0.0
        %501 = vmatpush.msra.mxu0 0.0
        %502 = vmatpush.msra.mxu0 0.0
        %503 = vmatpush.msra.mxu0 0.0
        %504 = vmatpush.msra.mxu0 %v463
        %505 = vmatmul.f32.gmra.mxu0 %v487
        %v506 = vpop.f32.mrf.mxu0
        %v507 = vadd.f32 %v484, %v506
        %508 = vdwg.mxu0
        %509 = vmatpush.msra.mxu0 0.0
        %510 = vmatpush.msra.mxu0 0.0
        %511 = vmatpush.msra.mxu0 0.0
        %512 = vmatpush.msra.mxu0 0.0
        %513 = vmatpush.msra.mxu0 0.0
        %514 = vmatpush.msra.mxu0 0.0
        %515 = vmatpush.msra.mxu0 0.0
        %516 = vmatpush.msra.mxu0 0.0
        %517 = vmatpush.msra.mxu0 0.0
        %518 = vmatpush.msra.mxu0 0.0
        %519 = vmatpush.msra.mxu0 0.0
        %520 = vmatpush.msra.mxu0 0.0
        %521 = vmatpush.msra.mxu0 0.0
        %522 = vmatpush.msra.mxu0 0.0
        %523 = vmatpush.msra.mxu0 0.0
        %524 = vmatpush.msra.mxu0 %v464
        %525 = vmatmul.f32.gmra.mxu0 %v487
        %v526 = vpop.f32.mrf.mxu0
        %v527 = vadd.f32 %v485, %v526
        %528 = vdwg.mxu0
        %v529 = vadd.f32 %v427, %v507
        %v530 = vadd.f32 %v447, %v527
        %s531 = scalar_lea.vmem %s7, 4
        %v532 = vld [vmem:[%s531] sm:$0x3]
        %533 = vrot.lane.b32.xlu0 %v361, 15
        %v534 = vpop.permute.xlu0 %533
        %535 = vrot.lane.b32.xlu0 %v362, 15
        %v536 = vpop.permute.xlu0 %535
        %vm537 = vcmp.lt.s32.totalorder %v370, 15
        %v538 = vsel %vm537, %v534, %v536
        %v539 = vsel %vm537, %v536, %v534
        %v541 = vperm.slane %v532, 0
        %v542 = vperm.slane %v532, 1
        %v545 = vmul.f32 %v539, %v541
        %v546 = vmul.f32 %v538, %v542
        %547 = vrot.lane.b32.xlu0 %v382, 15
        %v548 = vpop.permute.xlu0 %547
        %549 = vrot.lane.b32.xlu0 %v383, 15
        %v550 = vpop.permute.xlu0 %549
        %v551 = vsel %vm537, %v548, %v550
        %v552 = vsel %vm537, %v550, %v548
        %v553 = vmul.f32 %v552, %v541
        %v554 = vmul.f32 %v551, %v542
        %s555 = scalar_lea.vmem %s2, 16
        %v556 = vld [vmem:[%s555] sm:$0xff]
        %s557 = scalar_lea.vmem %s3, 16
        %v558 = vld [vmem:[%s557] sm:$0xff]
        %560 = vset.pattern.permute.xlu0 0
        %561 = vperm.xlu0 %560, %v558
        %v562 = vpop.permute.xlu0 %561
        %v564 = vperm.slane %v553, 0
        %v565 = vperm.slane %v554, 0
        %v566 = vmul.f32 %v562, %v564
        %v567 = vmul.f32 %v562, %v565
        %v569 = vsel %vm405, %v556, 0
        %571 = vmatpush.msra.mxu0 0.0
        %572 = vmatpush.msra.mxu0 0.0
        %573 = vmatpush.msra.mxu0 0.0
        %574 = vmatpush.msra.mxu0 0.0
        %575 = vmatpush.msra.mxu0 0.0
        %576 = vmatpush.msra.mxu0 0.0
        %577 = vmatpush.msra.mxu0 0.0
        %578 = vmatpush.msra.mxu0 0.0
        %579 = vmatpush.msra.mxu0 0.0
        %580 = vmatpush.msra.mxu0 0.0
        %581 = vmatpush.msra.mxu0 0.0
        %582 = vmatpush.msra.mxu0 0.0
        %583 = vmatpush.msra.mxu0 0.0
        %584 = vmatpush.msra.mxu0 0.0
        %585 = vmatpush.msra.mxu0 0.0
        %586 = vmatpush.msra.mxu0 %v545
        %587 = vmatmul.f32.gmra.mxu0 %v569
        %v588 = vpop.f32.mrf.mxu0
        %v589 = vadd.f32 %v566, %v588
        %590 = vdwg.mxu0
        %591 = vmatpush.msra.mxu0 0.0
        %592 = vmatpush.msra.mxu0 0.0
        %593 = vmatpush.msra.mxu0 0.0
        %594 = vmatpush.msra.mxu0 0.0
        %595 = vmatpush.msra.mxu0 0.0
        %596 = vmatpush.msra.mxu0 0.0
        %597 = vmatpush.msra.mxu0 0.0
        %598 = vmatpush.msra.mxu0 0.0
        %599 = vmatpush.msra.mxu0 0.0
        %600 = vmatpush.msra.mxu0 0.0
        %601 = vmatpush.msra.mxu0 0.0
        %602 = vmatpush.msra.mxu0 0.0
        %603 = vmatpush.msra.mxu0 0.0
        %604 = vmatpush.msra.mxu0 0.0
        %605 = vmatpush.msra.mxu0 0.0
        %606 = vmatpush.msra.mxu0 %v546
        %607 = vmatmul.f32.gmra.mxu0 %v569
        %v608 = vpop.f32.mrf.mxu0
        %v609 = vadd.f32 %v567, %v608
        %610 = vdwg.mxu0
        %v611 = vadd.f32 %v529, %v589
        %v612 = vadd.f32 %v530, %v609
        %s613 = scalar_lea.vmem %s7, 6
        %v614 = vld [vmem:[%s613] sm:$0x3]
        %615 = vrot.lane.b32.xlu0 %v361, 1
        %v616 = vpop.permute.xlu0 %615
        %617 = vrot.lane.b32.xlu0 %v362, 1
        %v618 = vpop.permute.xlu0 %617
        %vm619 = vcmp.lt.s32.totalorder %v370, 1
        %v620 = vsel %vm619, %v616, %v618
        %v621 = vsel %vm619, %v618, %v616
        %v623 = vperm.slane %v614, 0
        %v624 = vperm.slane %v614, 1
        %v627 = vmul.f32 %v621, %v623
        %v628 = vmul.f32 %v620, %v624
        %629 = vrot.lane.b32.xlu0 %v382, 1
        %v630 = vpop.permute.xlu0 %629
        %631 = vrot.lane.b32.xlu0 %v383, 1
        %v632 = vpop.permute.xlu0 %631
        %v633 = vsel %vm619, %v630, %v632
        %v634 = vsel %vm619, %v632, %v630
        %v635 = vmul.f32 %v634, %v623
        %v636 = vmul.f32 %v633, %v624
        %s637 = scalar_lea.vmem %s2, 24
        %v638 = vld [vmem:[%s637] sm:$0xff]
        %s639 = scalar_lea.vmem %s3, 24
        %v640 = vld [vmem:[%s639] sm:$0xff]
        %642 = vset.pattern.permute.xlu0 0
        %643 = vperm.xlu0 %642, %v640
        %v644 = vpop.permute.xlu0 %643
        %v646 = vperm.slane %v635, 0
        %v647 = vperm.slane %v636, 0
        %v648 = vmul.f32 %v644, %v646
        %v649 = vmul.f32 %v644, %v647
        %v651 = vsel %vm405, %v638, 0
        %653 = vmatpush.msra.mxu0 0.0
        %654 = vmatpush.msra.mxu0 0.0
        %655 = vmatpush.msra.mxu0 0.0
        %656 = vmatpush.msra.mxu0 0.0
        %657 = vmatpush.msra.mxu0 0.0
        %658 = vmatpush.msra.mxu0 0.0
        %659 = vmatpush.msra.mxu0 0.0
        %660 = vmatpush.msra.mxu0 0.0
        %661 = vmatpush.msra.mxu0 0.0
        %662 = vmatpush.msra.mxu0 0.0
        %663 = vmatpush.msra.mxu0 0.0
        %664 = vmatpush.msra.mxu0 0.0
        %665 = vmatpush.msra.mxu0 0.0
        %666 = vmatpush.msra.mxu0 0.0
        %667 = vmatpush.msra.mxu0 0.0
        %668 = vmatpush.msra.mxu0 %v627
        %669 = vmatmul.f32.gmra.mxu0 %v651
        %v670 = vpop.f32.mrf.mxu0
        %v671 = vadd.f32 %v648, %v670
        %672 = vdwg.mxu0
        %673 = vmatpush.msra.mxu0 0.0
        %674 = vmatpush.msra.mxu0 0.0
        %675 = vmatpush.msra.mxu0 0.0
        %676 = vmatpush.msra.mxu0 0.0
        %677 = vmatpush.msra.mxu0 0.0
        %678 = vmatpush.msra.mxu0 0.0
        %679 = vmatpush.msra.mxu0 0.0
        %680 = vmatpush.msra.mxu0 0.0
        %681 = vmatpush.msra.mxu0 0.0
        %682 = vmatpush.msra.mxu0 0.0
        %683 = vmatpush.msra.mxu0 0.0
        %684 = vmatpush.msra.mxu0 0.0
        %685 = vmatpush.msra.mxu0 0.0
        %686 = vmatpush.msra.mxu0 0.0
        %687 = vmatpush.msra.mxu0 0.0
        %688 = vmatpush.msra.mxu0 %v628
        %689 = vmatmul.f32.gmra.mxu0 %v651
        %v690 = vpop.f32.mrf.mxu0
        %v691 = vadd.f32 %v649, %v690
        %692 = vdwg.mxu0
        %v693 = vadd.f32 %v611, %v671
        %v694 = vadd.f32 %v612, %v691
        %s695 = scalar_lea.vmem %s2, 32
        %v696 = vld [vmem:[%s695] sm:$0xff]
        %s697 = scalar_lea.vmem %s3, 32
        %v698 = vld [vmem:[%s697] sm:$0xff]
        %700 = vset.pattern.permute.xlu0 0
        %701 = vperm.xlu0 %700, %v698
        %v702 = vpop.permute.xlu0 %701
        %v704 = vmul.f32 %v702, %v382
        %v705 = vmul.f32 %v702, %v383
        %v707 = vsel %vm405, %v696, 0
        %709 = vmatpush.msra.mxu0 0.0
        %710 = vmatpush.msra.mxu0 0.0
        %711 = vmatpush.msra.mxu0 0.0
        %712 = vmatpush.msra.mxu0 0.0
        %713 = vmatpush.msra.mxu0 0.0
        %714 = vmatpush.msra.mxu0 0.0
        %715 = vmatpush.msra.mxu0 0.0
        %716 = vmatpush.msra.mxu0 0.0
        %717 = vmatpush.msra.mxu0 0.0
        %718 = vmatpush.msra.mxu0 0.0
        %719 = vmatpush.msra.mxu0 0.0
        %720 = vmatpush.msra.mxu0 0.0
        %721 = vmatpush.msra.mxu0 0.0
        %722 = vmatpush.msra.mxu0 0.0
        %723 = vmatpush.msra.mxu0 0.0
        %724 = vmatpush.msra.mxu0 %v361
        %725 = vmatmul.f32.gmra.mxu0 %v707
        %v726 = vpop.f32.mrf.mxu0
        %v727 = vadd.f32 %v704, %v726
        %728 = vdwg.mxu0
        %729 = vmatpush.msra.mxu0 0.0
        %730 = vmatpush.msra.mxu0 0.0
        %731 = vmatpush.msra.mxu0 0.0
        %732 = vmatpush.msra.mxu0 0.0
        %733 = vmatpush.msra.mxu0 0.0
        %734 = vmatpush.msra.mxu0 0.0
        %735 = vmatpush.msra.mxu0 0.0
        %736 = vmatpush.msra.mxu0 0.0
        %737 = vmatpush.msra.mxu0 0.0
        %738 = vmatpush.msra.mxu0 0.0
        %739 = vmatpush.msra.mxu0 0.0
        %740 = vmatpush.msra.mxu0 0.0
        %741 = vmatpush.msra.mxu0 0.0
        %742 = vmatpush.msra.mxu0 0.0
        %743 = vmatpush.msra.mxu0 0.0
        %744 = vmatpush.msra.mxu0 %v362
        %745 = vmatmul.f32.gmra.mxu0 %v707
        %v746 = vpop.f32.mrf.mxu0
        %v747 = vadd.f32 %v705, %v746
        %748 = vdwg.mxu0
        %v749 = vadd.f32 %v693, %v727
        %v750 = vadd.f32 %v694, %v747
        %s751 = scalar_lea.vmem %s7, 10
        %v752 = vld [vmem:[%s751] sm:$0x3]
        %753 = vrot.lane.b32.xlu0 %v361, 127
        %v754 = vpop.permute.xlu0 %753
        %755 = vrot.lane.b32.xlu0 %v362, 127
        %v756 = vpop.permute.xlu0 %755
        %vm757 = vcmp.lt.s32.totalorder %v370, 127
        %v758 = vsel %vm757, %v754, %v756
        %v759 = vsel %vm757, %v756, %v754
        %v761 = vperm.slane %v752, 0
        %v762 = vperm.slane %v752, 1
        %v765 = vmul.f32 %v758, %v761
        %v766 = vmul.f32 %v759, %v762
        %767 = vrot.lane.b32.xlu0 %v382, 127
        %v768 = vpop.permute.xlu0 %767
        %769 = vrot.lane.b32.xlu0 %v383, 127
        %v770 = vpop.permute.xlu0 %769
        %v771 = vsel %vm757, %v768, %v770
        %v772 = vsel %vm757, %v770, %v768
        %v773 = vmul.f32 %v771, %v761
        %v774 = vmul.f32 %v772, %v762
        %s775 = scalar_lea.vmem %s2, 40
        %v776 = vld [vmem:[%s775] sm:$0xff]
        %s777 = scalar_lea.vmem %s3, 40
        %v778 = vld [vmem:[%s777] sm:$0xff]
        %780 = vset.pattern.permute.xlu0 0
        %781 = vperm.xlu0 %780, %v778
        %v782 = vpop.permute.xlu0 %781
        %v784 = vperm.slane %v773, 0
        %v785 = vperm.slane %v774, 0
        %v786 = vmul.f32 %v782, %v784
        %v787 = vmul.f32 %v782, %v785
        %v789 = vsel %vm405, %v776, 0
        %791 = vmatpush.msra.mxu0 0.0
        %792 = vmatpush.msra.mxu0 0.0
        %793 = vmatpush.msra.mxu0 0.0
        %794 = vmatpush.msra.mxu0 0.0
        %795 = vmatpush.msra.mxu0 0.0
        %796 = vmatpush.msra.mxu0 0.0
        %797 = vmatpush.msra.mxu0 0.0
        %798 = vmatpush.msra.mxu0 0.0
        %799 = vmatpush.msra.mxu0 0.0
        %800 = vmatpush.msra.mxu0 0.0
        %801 = vmatpush.msra.mxu0 0.0
        %802 = vmatpush.msra.mxu0 0.0
        %803 = vmatpush.msra.mxu0 0.0
        %804 = vmatpush.msra.mxu0 0.0
        %805 = vmatpush.msra.mxu0 0.0
        %806 = vmatpush.msra.mxu0 %v765
        %807 = vmatmul.f32.gmra.mxu0 %v789
        %v808 = vpop.f32.mrf.mxu0
        %v809 = vadd.f32 %v786, %v808
        %810 = vdwg.mxu0
        %811 = vmatpush.msra.mxu0 0.0
        %812 = vmatpush.msra.mxu0 0.0
        %813 = vmatpush.msra.mxu0 0.0
        %814 = vmatpush.msra.mxu0 0.0
        %815 = vmatpush.msra.mxu0 0.0
        %816 = vmatpush.msra.mxu0 0.0
        %817 = vmatpush.msra.mxu0 0.0
        %818 = vmatpush.msra.mxu0 0.0
        %819 = vmatpush.msra.mxu0 0.0
        %820 = vmatpush.msra.mxu0 0.0
        %821 = vmatpush.msra.mxu0 0.0
        %822 = vmatpush.msra.mxu0 0.0
        %823 = vmatpush.msra.mxu0 0.0
        %824 = vmatpush.msra.mxu0 0.0
        %825 = vmatpush.msra.mxu0 0.0
        %826 = vmatpush.msra.mxu0 %v766
        %827 = vmatmul.f32.gmra.mxu0 %v789
        %v828 = vpop.f32.mrf.mxu0
        %v829 = vadd.f32 %v787, %v828
        %830 = vdwg.mxu0
        %v831 = vadd.f32 %v749, %v809
        %v832 = vadd.f32 %v750, %v829
        %s833 = scalar_lea.vmem %s7, 12
        %v834 = vld [vmem:[%s833] sm:$0x3]
        %835 = vrot.lane.b32.xlu0 %v361, 113
        %v836 = vpop.permute.xlu0 %835
        %837 = vrot.lane.b32.xlu0 %v362, 113
        %v838 = vpop.permute.xlu0 %837
        %vm839 = vcmp.lt.s32.totalorder %v370, 113
        %v840 = vsel %vm839, %v836, %v838
        %v841 = vsel %vm839, %v838, %v836
        %v843 = vperm.slane %v834, 0
        %v844 = vperm.slane %v834, 1
        %v847 = vmul.f32 %v840, %v843
        %v848 = vmul.f32 %v841, %v844
        %849 = vrot.lane.b32.xlu0 %v382, 113
        %v850 = vpop.permute.xlu0 %849
        %851 = vrot.lane.b32.xlu0 %v383, 113
        %v852 = vpop.permute.xlu0 %851
        %v853 = vsel %vm839, %v850, %v852
        %v854 = vsel %vm839, %v852, %v850
        %v855 = vmul.f32 %v853, %v843
        %v856 = vmul.f32 %v854, %v844
        %s857 = scalar_lea.vmem %s2, 48
        %v858 = vld [vmem:[%s857] sm:$0xff]
        %s859 = scalar_lea.vmem %s3, 48
        %v860 = vld [vmem:[%s859] sm:$0xff]
        %862 = vset.pattern.permute.xlu0 0
        %863 = vperm.xlu0 %862, %v860
        %v864 = vpop.permute.xlu0 %863
        %v866 = vperm.slane %v855, 0
        %v867 = vperm.slane %v856, 0
        %v868 = vmul.f32 %v864, %v866
        %v869 = vmul.f32 %v864, %v867
        %v871 = vsel %vm405, %v858, 0
        %873 = vmatpush.msra.mxu0 0.0
        %874 = vmatpush.msra.mxu0 0.0
        %875 = vmatpush.msra.mxu0 0.0
        %876 = vmatpush.msra.mxu0 0.0
        %877 = vmatpush.msra.mxu0 0.0
        %878 = vmatpush.msra.mxu0 0.0
        %879 = vmatpush.msra.mxu0 0.0
        %880 = vmatpush.msra.mxu0 0.0
        %881 = vmatpush.msra.mxu0 0.0
        %882 = vmatpush.msra.mxu0 0.0
        %883 = vmatpush.msra.mxu0 0.0
        %884 = vmatpush.msra.mxu0 0.0
        %885 = vmatpush.msra.mxu0 0.0
        %886 = vmatpush.msra.mxu0 0.0
        %887 = vmatpush.msra.mxu0 0.0
        %888 = vmatpush.msra.mxu0 %v847
        %889 = vmatmul.f32.gmra.mxu0 %v871
        %v890 = vpop.f32.mrf.mxu0
        %v891 = vadd.f32 %v868, %v890
        %892 = vdwg.mxu0
        %893 = vmatpush.msra.mxu0 0.0
        %894 = vmatpush.msra.mxu0 0.0
        %895 = vmatpush.msra.mxu0 0.0
        %896 = vmatpush.msra.mxu0 0.0
        %897 = vmatpush.msra.mxu0 0.0
        %898 = vmatpush.msra.mxu0 0.0
        %899 = vmatpush.msra.mxu0 0.0
        %900 = vmatpush.msra.mxu0 0.0
        %901 = vmatpush.msra.mxu0 0.0
        %902 = vmatpush.msra.mxu0 0.0
        %903 = vmatpush.msra.mxu0 0.0
        %904 = vmatpush.msra.mxu0 0.0
        %905 = vmatpush.msra.mxu0 0.0
        %906 = vmatpush.msra.mxu0 0.0
        %907 = vmatpush.msra.mxu0 0.0
        %908 = vmatpush.msra.mxu0 %v848
        %909 = vmatmul.f32.gmra.mxu0 %v871
        %v910 = vpop.f32.mrf.mxu0
        %v911 = vadd.f32 %v869, %v910
        %912 = vdwg.mxu0
        %v913 = vadd.f32 %v831, %v891
        %v914 = vadd.f32 %v832, %v911
        %s915 = scalar_lea.vmem %s7, 14
        %v916 = vld [vmem:[%s915] sm:$0x3]
        %917 = vrot.lane.b32.xlu0 %v361, 112
        %v918 = vpop.permute.xlu0 %917
        %919 = vrot.lane.b32.xlu0 %v362, 112
        %v920 = vpop.permute.xlu0 %919
        %vm921 = vcmp.lt.s32.totalorder %v370, 112
        %v922 = vsel %vm921, %v918, %v920
        %v923 = vsel %vm921, %v920, %v918
        %v925 = vperm.slane %v916, 0
        %v926 = vperm.slane %v916, 1
        %v929 = vmul.f32 %v922, %v925
        %v930 = vmul.f32 %v923, %v926
        %931 = vrot.lane.b32.xlu0 %v382, 112
        %v932 = vpop.permute.xlu0 %931
        %933 = vrot.lane.b32.xlu0 %v383, 112
        %v934 = vpop.permute.xlu0 %933
        %v935 = vsel %vm921, %v932, %v934
        %v936 = vsel %vm921, %v934, %v932
        %v937 = vmul.f32 %v935, %v925
        %v938 = vmul.f32 %v936, %v926
        %s939 = scalar_lea.vmem %s2, 56
        %v940 = vld [vmem:[%s939] sm:$0xff]
        %s941 = scalar_lea.vmem %s3, 56
        %v942 = vld [vmem:[%s941] sm:$0xff]
        %944 = vset.pattern.permute.xlu0 0
        %945 = vperm.xlu0 %944, %v942
        %v946 = vpop.permute.xlu0 %945
        %v948 = vperm.slane %v937, 0
        %v949 = vperm.slane %v938, 0
        %v950 = vmul.f32 %v946, %v948
        %v951 = vmul.f32 %v946, %v949
        %v953 = vsel %vm405, %v940, 0
        %955 = vmatpush.msra.mxu0 0.0
        %956 = vmatpush.msra.mxu0 0.0
        %957 = vmatpush.msra.mxu0 0.0
        %958 = vmatpush.msra.mxu0 0.0
        %959 = vmatpush.msra.mxu0 0.0
        %960 = vmatpush.msra.mxu0 0.0
        %961 = vmatpush.msra.mxu0 0.0
        %962 = vmatpush.msra.mxu0 0.0
        %963 = vmatpush.msra.mxu0 0.0
        %964 = vmatpush.msra.mxu0 0.0
        %965 = vmatpush.msra.mxu0 0.0
        %966 = vmatpush.msra.mxu0 0.0
        %967 = vmatpush.msra.mxu0 0.0
        %968 = vmatpush.msra.mxu0 0.0
        %969 = vmatpush.msra.mxu0 0.0
        %970 = vmatpush.msra.mxu0 %v929
        %971 = vmatmul.f32.gmra.mxu0 %v953
        %v972 = vpop.f32.mrf.mxu0
        %v973 = vadd.f32 %v950, %v972
        %974 = vdwg.mxu0
        %975 = vmatpush.msra.mxu0 0.0
        %976 = vmatpush.msra.mxu0 0.0
        %977 = vmatpush.msra.mxu0 0.0
        %978 = vmatpush.msra.mxu0 0.0
        %979 = vmatpush.msra.mxu0 0.0
        %980 = vmatpush.msra.mxu0 0.0
        %981 = vmatpush.msra.mxu0 0.0
        %982 = vmatpush.msra.mxu0 0.0
        %983 = vmatpush.msra.mxu0 0.0
        %984 = vmatpush.msra.mxu0 0.0
        %985 = vmatpush.msra.mxu0 0.0
        %986 = vmatpush.msra.mxu0 0.0
        %987 = vmatpush.msra.mxu0 0.0
        %988 = vmatpush.msra.mxu0 0.0
        %989 = vmatpush.msra.mxu0 0.0
        %990 = vmatpush.msra.mxu0 %v930
        %991 = vmatmul.f32.gmra.mxu0 %v953
        %v992 = vpop.f32.mrf.mxu0
        %v993 = vadd.f32 %v951, %v992
        %994 = vdwg.mxu0
        %v995 = vadd.f32 %v913, %v973
        %v996 = vadd.f32 %v914, %v993
        %s997 = scalar_lea.vmem %s7, 16
        %v998 = vld [vmem:[%s997] sm:$0x3]
        %999 = vrot.lane.b32.xlu0 %v361, 111
        %v1000 = vpop.permute.xlu0 %999
        %1001 = vrot.lane.b32.xlu0 %v362, 111
        %v1002 = vpop.permute.xlu0 %1001
        %vm1003 = vcmp.lt.s32.totalorder %v370, 111
        %v1004 = vsel %vm1003, %v1000, %v1002
        %v1005 = vsel %vm1003, %v1002, %v1000
        %v1007 = vperm.slane %v998, 0
        %v1008 = vperm.slane %v998, 1
        %v1011 = vmul.f32 %v1004, %v1007
        %v1012 = vmul.f32 %v1005, %v1008
        %1013 = vrot.lane.b32.xlu0 %v382, 111
        %v1014 = vpop.permute.xlu0 %1013
        %1015 = vrot.lane.b32.xlu0 %v383, 111
        %v1016 = vpop.permute.xlu0 %1015
        %v1017 = vsel %vm1003, %v1014, %v1016
        %v1018 = vsel %vm1003, %v1016, %v1014
        %v1019 = vmul.f32 %v1017, %v1007
        %v1020 = vmul.f32 %v1018, %v1008
        %s1021 = scalar_lea.vmem %s2, 64
        %v1022 = vld [vmem:[%s1021] sm:$0xff]
        %s1023 = scalar_lea.vmem %s3, 64
        %v1024 = vld [vmem:[%s1023] sm:$0xff]
        %1026 = vset.pattern.permute.xlu0 0
        %1027 = vperm.xlu0 %1026, %v1024
        %v1028 = vpop.permute.xlu0 %1027
        %v1030 = vperm.slane %v1019, 0
        %v1031 = vperm.slane %v1020, 0
        %v1032 = vmul.f32 %v1028, %v1030
        %v1033 = vmul.f32 %v1028, %v1031
        %v1035 = vsel %vm405, %v1022, 0
        %1037 = vmatpush.msra.mxu0 0.0
        %1038 = vmatpush.msra.mxu0 0.0
        %1039 = vmatpush.msra.mxu0 0.0
        %1040 = vmatpush.msra.mxu0 0.0
        %1041 = vmatpush.msra.mxu0 0.0
        %1042 = vmatpush.msra.mxu0 0.0
        %1043 = vmatpush.msra.mxu0 0.0
        %1044 = vmatpush.msra.mxu0 0.0
        %1045 = vmatpush.msra.mxu0 0.0
        %1046 = vmatpush.msra.mxu0 0.0
        %1047 = vmatpush.msra.mxu0 0.0
        %1048 = vmatpush.msra.mxu0 0.0
        %1049 = vmatpush.msra.mxu0 0.0
        %1050 = vmatpush.msra.mxu0 0.0
        %1051 = vmatpush.msra.mxu0 0.0
        %1052 = vmatpush.msra.mxu0 %v1011
        %1053 = vmatmul.f32.gmra.mxu0 %v1035
        %v1054 = vpop.f32.mrf.mxu0
        %v1055 = vadd.f32 %v1032, %v1054
        %1056 = vdwg.mxu0
        %1057 = vmatpush.msra.mxu0 0.0
        %1058 = vmatpush.msra.mxu0 0.0
        %1059 = vmatpush.msra.mxu0 0.0
        %1060 = vmatpush.msra.mxu0 0.0
        %1061 = vmatpush.msra.mxu0 0.0
        %1062 = vmatpush.msra.mxu0 0.0
        %1063 = vmatpush.msra.mxu0 0.0
        %1064 = vmatpush.msra.mxu0 0.0
        %1065 = vmatpush.msra.mxu0 0.0
        %1066 = vmatpush.msra.mxu0 0.0
        %1067 = vmatpush.msra.mxu0 0.0
        %1068 = vmatpush.msra.mxu0 0.0
        %1069 = vmatpush.msra.mxu0 0.0
        %1070 = vmatpush.msra.mxu0 0.0
        %1071 = vmatpush.msra.mxu0 0.0
        %1072 = vmatpush.msra.mxu0 %v1012
        %1073 = vmatmul.f32.gmra.mxu0 %v1035
        %v1074 = vpop.f32.mrf.mxu0
        %v1075 = vadd.f32 %v1033, %v1074
        %1076 = vdwg.mxu0
        %v1077 = vadd.f32 %v995, %v1055
        %v1078 = vadd.f32 %v996, %v1075
        %v1079 = vld [vmem:[%s4] sm:$0xff]
        %1081 = vset.pattern.permute.xlu0 0
        %1082 = vperm.xlu0 %1081, %v1079
        %v1083 = vpop.permute.xlu0 %1082
        %v1085 = vadd.f32 %v1077, %v1083
        %v1086 = vadd.f32 %v1078, %v1083
        %v1087 = vmax.f32 %v1085, 0.0
        %v1088 = vmax.f32 %v1086, 0.0
        %v1089 = vadd.f32 %v361, %v1087
        %v1090 = vadd.f32 %v362, %v1088
        %1091 = vst [vmem:[%s344] sm:$0xff] %v1089
        %1092 = vst [vmem:[%s344 + $0x8] sm:$0xff] %v1090
        %v1093 = vld [vmem:[%s5] sm:$0xff]
        %v1094 = vld [vmem:[%s5 + $0x8] sm:$0x1]
        %v1096 = vsel %vm405, %v1093, 0
        %v1099 = vsel %vm405, %v1094, 0
        %1101 = vmatpush.msra.mxu0 0.0
        %1102 = vmatpush.msra.mxu0 0.0
        %1103 = vmatpush.msra.mxu0 0.0
        %1104 = vmatpush.msra.mxu0 0.0
        %1105 = vmatpush.msra.mxu0 0.0
        %1106 = vmatpush.msra.mxu0 0.0
        %1107 = vmatpush.msra.mxu0 0.0
        %1108 = vmatpush.msra.mxu0 0.0
        %1109 = vmatpush.msra.mxu0 0.0
        %1110 = vmatpush.msra.mxu0 0.0
        %1111 = vmatpush.msra.mxu0 0.0
        %1112 = vmatpush.msra.mxu0 0.0
        %1113 = vmatpush.msra.mxu0 0.0
        %1114 = vmatpush.msra.mxu0 0.0
        %1115 = vmatpush.msra.mxu0 0.0
        %1116 = vmatpush.msra.mxu0 %v1089
        %1117 = vmatmul.f32.gmra.mxu0 %v1096
        %v1118 = vpop.f32.mrf.mxu0
        %v1119 = vadd.f32 0.0, %v1118
        %1120 = vmatmul.f32.gmra.mxu0 %v1099
        %v1121 = vpop.f32.mrf.mxu0
        %v1122 = vadd.f32 0.0, %v1121
        %1123 = vdwg.mxu0
        %1124 = vmatpush.msra.mxu0 0.0
        %1125 = vmatpush.msra.mxu0 0.0
        %1126 = vmatpush.msra.mxu0 0.0
        %1127 = vmatpush.msra.mxu0 0.0
        %1128 = vmatpush.msra.mxu0 0.0
        %1129 = vmatpush.msra.mxu0 0.0
        %1130 = vmatpush.msra.mxu0 0.0
        %1131 = vmatpush.msra.mxu0 0.0
        %1132 = vmatpush.msra.mxu0 0.0
        %1133 = vmatpush.msra.mxu0 0.0
        %1134 = vmatpush.msra.mxu0 0.0
        %1135 = vmatpush.msra.mxu0 0.0
        %1136 = vmatpush.msra.mxu0 0.0
        %1137 = vmatpush.msra.mxu0 0.0
        %1138 = vmatpush.msra.mxu0 0.0
        %1139 = vmatpush.msra.mxu0 %v1090
        %1140 = vmatmul.f32.gmra.mxu0 %v1096
        %v1141 = vpop.f32.mrf.mxu0
        %v1142 = vadd.f32 0.0, %v1141
        %1143 = vmatmul.f32.gmra.mxu0 %v1099
        %v1144 = vpop.f32.mrf.mxu0
        %v1145 = vadd.f32 0.0, %v1144
        %1146 = vdwg.mxu0
        %1147 = vrot.lane.b32.xlu0 %v1119, 17
        %v1148 = vpop.permute.xlu0 %1147
        %1149 = vrot.lane.b32.xlu0 %v1142, 17
        %v1150 = vpop.permute.xlu0 %1149
        %v1151 = vsel %vm371, %v1148, %v1150
        %v1152 = vsel %vm371, %v1150, %v1148
        %v1153 = vld [vmem:[%s7] sm:$0x3]
        %v1155 = vperm.slane %v1153, 0
        %v1156 = vperm.slane %v1153, 1
        %v1159 = vmul.f32 %v1152, %v1155
        %v1160 = vmul.f32 %v1151, %v1156
        %v1163 = vrot.slane %v1119, 1
        %v1164 = vrot.slane %v1142, 1
        %1167 = vrot.lane.b32.xlu0 %v1163, 16
        %v1168 = vpop.permute.xlu0 %1167
        %1169 = vrot.lane.b32.xlu0 %v1164, 16
        %v1170 = vpop.permute.xlu0 %1169
        %v1171 = vsel %vm455, %v1168, %v1170
        %v1172 = vsel %vm455, %v1170, %v1168
        %v1173 = vld [vmem:[%s449] sm:$0x3]
        %v1175 = vperm.slane %v1173, 0
        %v1176 = vperm.slane %v1173, 1
        %v1179 = vmul.f32 %v1172, %v1175
        %v1180 = vmul.f32 %v1171, %v1176
        %v1181 = vadd.f32 %v1159, %v1179
        %v1182 = vadd.f32 %v1160, %v1180
        %v1183 = vrot.slane %v1119, 2
        %v1184 = vrot.slane %v1142, 2
        %1187 = vrot.lane.b32.xlu0 %v1183, 15
        %v1188 = vpop.permute.xlu0 %1187
        %1189 = vrot.lane.b32.xlu0 %v1184, 15
        %v1190 = vpop.permute.xlu0 %1189
        %v1191 = vsel %vm537, %v1188, %v1190
        %v1192 = vsel %vm537, %v1190, %v1188
        %v1193 = vld [vmem:[%s531] sm:$0x3]
        %v1195 = vperm.slane %v1193, 0
        %v1196 = vperm.slane %v1193, 1
        %v1199 = vmul.f32 %v1192, %v1195
        %v1200 = vmul.f32 %v1191, %v1196
        %v1201 = vadd.f32 %v1181, %v1199
        %v1202 = vadd.f32 %v1182, %v1200
        %v1203 = vrot.slane %v1119, 3
        %v1204 = vrot.slane %v1142, 3
        %1207 = vrot.lane.b32.xlu0 %v1203, 1
        %v1208 = vpop.permute.xlu0 %1207
        %1209 = vrot.lane.b32.xlu0 %v1204, 1
        %v1210 = vpop.permute.xlu0 %1209
        %v1211 = vsel %vm619, %v1208, %v1210
        %v1212 = vsel %vm619, %v1210, %v1208
        %v1213 = vld [vmem:[%s613] sm:$0x3]
        %v1215 = vperm.slane %v1213, 0
        %v1216 = vperm.slane %v1213, 1
        %v1219 = vmul.f32 %v1212, %v1215
        %v1220 = vmul.f32 %v1211, %v1216
        %v1221 = vadd.f32 %v1201, %v1219
        %v1222 = vadd.f32 %v1202, %v1220
        %v1223 = vrot.slane %v1119, 4
        %v1224 = vrot.slane %v1142, 4
        %v1227 = vadd.f32 %v1221, %v1223
        %v1228 = vadd.f32 %v1222, %v1224
        %v1229 = vrot.slane %v1119, 5
        %v1230 = vrot.slane %v1142, 5
        %1233 = vrot.lane.b32.xlu0 %v1229, 127
        %v1234 = vpop.permute.xlu0 %1233
        %1235 = vrot.lane.b32.xlu0 %v1230, 127
        %v1236 = vpop.permute.xlu0 %1235
        %v1237 = vsel %vm757, %v1234, %v1236
        %v1238 = vsel %vm757, %v1236, %v1234
        %v1239 = vld [vmem:[%s751] sm:$0x3]
        %v1241 = vperm.slane %v1239, 0
        %v1242 = vperm.slane %v1239, 1
        %v1245 = vmul.f32 %v1237, %v1241
        %v1246 = vmul.f32 %v1238, %v1242
        %v1247 = vadd.f32 %v1227, %v1245
        %v1248 = vadd.f32 %v1228, %v1246
        %v1249 = vrot.slane %v1119, 6
        %v1250 = vrot.slane %v1142, 6
        %1253 = vrot.lane.b32.xlu0 %v1249, 113
        %v1254 = vpop.permute.xlu0 %1253
        %1255 = vrot.lane.b32.xlu0 %v1250, 113
        %v1256 = vpop.permute.xlu0 %1255
        %v1257 = vsel %vm839, %v1254, %v1256
        %v1258 = vsel %vm839, %v1256, %v1254
        %v1259 = vld [vmem:[%s833] sm:$0x3]
        %v1261 = vperm.slane %v1259, 0
        %v1262 = vperm.slane %v1259, 1
        %v1265 = vmul.f32 %v1257, %v1261
        %v1266 = vmul.f32 %v1258, %v1262
        %v1267 = vadd.f32 %v1247, %v1265
        %v1268 = vadd.f32 %v1248, %v1266
        %v1269 = vrot.slane %v1119, 7
        %v1270 = vrot.slane %v1142, 7
        %1273 = vrot.lane.b32.xlu0 %v1269, 112
        %v1274 = vpop.permute.xlu0 %1273
        %1275 = vrot.lane.b32.xlu0 %v1270, 112
        %v1276 = vpop.permute.xlu0 %1275
        %v1277 = vsel %vm921, %v1274, %v1276
        %v1278 = vsel %vm921, %v1276, %v1274
        %v1279 = vld [vmem:[%s915] sm:$0x3]
        %v1281 = vperm.slane %v1279, 0
        %v1282 = vperm.slane %v1279, 1
        %v1285 = vmul.f32 %v1277, %v1281
        %v1286 = vmul.f32 %v1278, %v1282
        %v1287 = vadd.f32 %v1267, %v1285
        %v1288 = vadd.f32 %v1268, %v1286
        %1289 = vrot.lane.b32.xlu0 %v1122, 111
        %v1290 = vpop.permute.xlu0 %1289
        %1291 = vrot.lane.b32.xlu0 %v1145, 111
        %v1292 = vpop.permute.xlu0 %1291
        %v1293 = vsel %vm1003, %v1290, %v1292
        %v1294 = vsel %vm1003, %v1292, %v1290
        %v1295 = vld [vmem:[%s997] sm:$0x3]
        %v1297 = vperm.slane %v1295, 0
        %v1298 = vperm.slane %v1295, 1
        %v1301 = vmul.f32 %v1293, %v1297
        %v1302 = vmul.f32 %v1294, %v1298
        %v1303 = vadd.f32 %v1287, %v1301
        %v1304 = vadd.f32 %v1288, %v1302
        %v1307 = vrot.slane %v1304, 7
        %vm1308 = vcmask 1040384
        %v1309 = vsel %vm1308, %v1303, %v1307
        %v1311 = vadd.f32 %v363, %v1309
        %v1312 = vld [vmem:[#allocation2] sm:$0x1]
        %1314 = vset.pattern.permute.xlu0 0
        %1315 = vperm.xlu0 %1314, %v1312
        %v1316 = vpop.permute.xlu0 %1315
        %v1318 = vperm.slane %v1316, 0
        %v1319 = vadd.f32 %v1311, %v1318
        %v1320 = vlaneseq
        %vm1321 = vcmp.ge.s32.totalorder %v1320, 0
        %vm1322 = vcmp.lt.s32.totalorder %v1320, 256
        %vm1323 = vmand %vm1321, %vm1322
        %1324 = vst.msk [vmem:[%s351] sm:$0x3] %vm1323, %v1319
        %s1325 = sand.u32 %s215, 1
        %s1326 = scalar_lea.sflag [#allocation4], %s1325
        %s1327 = sand.u32 %s215, 1
        %s1328 = smul.addr %s1327, 16
        %s1329 = scalar_lea.vmem [#allocation3], %s1328
        %s1330 = sand.u32 %s241, 1
        %s1331 = scalar_lea.sflag [#allocation6], %s1330
        %s1332 = sand.u32 %s241, 1
        %s1333 = smul.addr %s1332, 2
        %s1334 = scalar_lea.vmem [#allocation5], %s1333
        // Predicated region
        $region53: #{tpu_custom_call.1} parent=51 // pred_check
          %p1335 = pneg %p225
        $region54: #{tpu_custom_call.1} parent=51 // pred_check_branch
          %1337 = sbr.rel (%p1335) target = $region56
        $region55: #{tpu_custom_call.1} parent=51 // pred_region
          %1339 = vsyncadd %s1326, 0
          %s1340 = smul.addr %s29, 2
          %s1341 = smul.addr %s1340, 8
          %s1342 = scalar_lea.hbm %s8, %s1341
          %s1344 = sshll.u32 %s1329, 4
          %s1345 = int_to_ptr.vmem [resolvable:$true] %s1344
          %s1346 = sshll.u32 %s1342, 4
          %s1347 = int_to_ptr.hbm [resolvable:$true] %s1346
          %1349 = dma.vmem_to_hbm [thread:$0]  %s1345, 256, %s1347, %s1326
        $region56: #{tpu_custom_call.1} parent=51 // pred_fallthru
          _
        // Predicated region
        $region57: #{tpu_custom_call.1} parent=51 // pred_check
          %p1350 = pneg %p251
        $region58: #{tpu_custom_call.1} parent=51 // pred_check_branch
          %1352 = sbr.rel (%p1350) target = $region60
        $region59: #{tpu_custom_call.1} parent=51 // pred_region
          %1354 = vsyncadd %s1331, 0
          %s1355 = smul.addr %s29, 2
          %s1356 = scalar_lea.hbm %s9, %s1355
          %s1358 = sshll.u32 %s1334, 4
          %s1359 = int_to_ptr.vmem [resolvable:$true] %s1358
          %s1360 = sshll.u32 %s1356, 4
          %s1361 = int_to_ptr.hbm [resolvable:$true] %s1360
          %1363 = dma.vmem_to_hbm [thread:$0]  %s1359, 32, %s1361, %s1331
        $region60: #{tpu_custom_call.1} parent=51 // pred_fallthru
          _
      $region52: #{tpu_custom_call.1} parent=5 // pred_fallthru
        _
      %p1364 = scmp.le.s32.totalorder 2, %s24
      // Predicated region
      $region61: #{tpu_custom_call.1} parent=5 // pred_check
        %p1365 = pneg %p1364
      $region62: #{tpu_custom_call.1} parent=5 // pred_check_branch
        %1367 = sbr.rel (%p1365) target = $region64
      $region63: #{tpu_custom_call.1} parent=5 // pred_region
        %s1368 = ssub.s32 %s24, 2
        // Predicated region
        $region65: #{tpu_custom_call.1} parent=63 // pred_check
          %p1369 = pneg %p231
        $region66: #{tpu_custom_call.1} parent=63 // pred_check_branch
          %1371 = sbr.rel (%p1369) target = $region68
        $region67: #{tpu_custom_call.1} parent=63 // pred_region
          %s1372 = sand.u32 %s216, 1
          %s1373 = scalar_lea.sflag [#allocation4], %s1372
          %s1374 = sand.u32 %s216, 1
          %s1375 = smul.addr %s1374, 16
          %s1376 = scalar_lea.vmem [#allocation3], %s1375
          %1378 = dma.done %s1373, 256
        $region68: #{tpu_custom_call.1} parent=63 // pred_fallthru
          _
        // Predicated region
        $region69: #{tpu_custom_call.1} parent=63 // pred_check
          %p1379 = pneg %p257
        $region70: #{tpu_custom_call.1} parent=63 // pred_check_branch
          %1381 = sbr.rel (%p1379) target = $region72
        $region71: #{tpu_custom_call.1} parent=63 // pred_region
          %s1382 = sand.u32 %s242, 1
          %s1383 = scalar_lea.sflag [#allocation6], %s1382
          %s1384 = sand.u32 %s242, 1
          %s1385 = smul.addr %s1384, 2
          %s1386 = scalar_lea.vmem [#allocation5], %s1385
          %1388 = dma.done %s1383, 32
        $region72: #{tpu_custom_call.1} parent=63 // pred_fallthru
          _
      $region64: #{tpu_custom_call.1} parent=5 // pred_fallthru
        _
    $region6: #{tpu_custom_call.1} parent=1 // loop_footer
      %s28 = sadd.s32 1, %s24
    $region7: #{tpu_custom_call.1} parent=1 // loop_footer_branch
      %23 = sbr.rel target = $region3
    $region8: #{tpu_custom_call.1} parent=1 // loop_exit
      _
    %1389 = vsyncpa [#allocation4], 1
    %s1390 = scalar_lea.sflag [#allocation4], 1
    %1391 = vsyncpa %s1390, 1
    %1392 = vsyncpa [#allocation6], 1
    %s1393 = scalar_lea.sflag [#allocation6], 1
    %1394 = vsyncpa %s1393, 1

</llo_original>
